<compile_context>
chip_gen: v7x
topology: tpu7x:2x2x1
jax: 0.10.0
libtpu: 0.0.40
codegen_flags: <defaults>
</compile_context>

<pallas_src>
import functools

import jax
import jax.numpy as jnp
from jax.experimental import pallas as pl
from jax.experimental.pallas import tpu as pltpu

# Safe on v5e/v6e (128 MiB physical) and v7x (64 MiB physical) VMEM.
_VMEM_LIMIT = 48 * 1024 * 1024


# ---------------------------------------------------------------------------
# Kernel 1: fused Q/K/V projections (row-tiled, weights resident)
# ---------------------------------------------------------------------------
def _qkv_kernel(tar_ref, src_ref, wq_ref, bq_ref, wk_ref, bk_ref,
                wv_ref, bv_ref, q_ref, k_ref, v_ref):
    tb = tar_ref[...].astype(jnp.bfloat16)
    sb = src_ref[...].astype(jnp.bfloat16)          # one read serves K and V
    q_ref[...] = (jnp.dot(tb, wq_ref[...], preferred_element_type=jnp.float32)
                  + bq_ref[...])
    k_ref[...] = (jnp.dot(sb, wk_ref[...], preferred_element_type=jnp.float32)
                  + bk_ref[...])
    v_ref[...] = (jnp.dot(sb, wv_ref[...], preferred_element_type=jnp.float32)
                  + bv_ref[...])


def qkv_proj(tar2d, src2d, wq, bq, wk, bk, wv, bv, *, tile_n):
    N, D = tar2d.shape
    row = pl.BlockSpec((tile_n, D), lambda i: (i, 0))
    wsp = pl.BlockSpec((D, D), lambda i: (0, 0))      # resident across tiles
    bsp = pl.BlockSpec((1, D), lambda i: (0, 0))
    cost = pl.CostEstimate(flops=int(6 * N * D * D), transcendentals=0,
                           bytes_accessed=int(5 * N * D * 4 + 3 * D * D * 2))
    return pl.pallas_call(
        _qkv_kernel,
        grid=(pl.cdiv(N, tile_n),),
        out_shape=(jax.ShapeDtypeStruct((N, D), jnp.float32),) * 3,
        in_specs=[row, row, wsp, bsp, wsp, bsp, wsp, bsp],
        out_specs=(row, row, row),
        compiler_params=pltpu.CompilerParams(
            dimension_semantics=("parallel",),
            vmem_limit_bytes=_VMEM_LIMIT),
        cost_estimate=cost,
    )(tar2d, src2d, wq, bq, wk, bk, wv, bv)


# ---------------------------------------------------------------------------
# Kernel 2: per-batch attention (all heads) + out_proj + residual + LayerNorm1
# ---------------------------------------------------------------------------
def _attn_out_ln_kernel(q_ref, k_ref, v_ref, res_ref, wo_ref, bo_ref,
                        g_ref, be_ref, o_ref, *, nhead, scale):
    q = q_ref[...]              # (T, D) f32, heads packed along the last dim
    k = k_ref[...]              # (S, D)
    v = v_ref[...]              # (S, D)
    T, D = q.shape
    hd = D // nhead

    acc = jnp.zeros((T, D), jnp.float32)
    for h in range(nhead):                                   # static unroll
        lo = h * hd
        qh = (q[:, lo:lo + hd] * scale).astype(jnp.bfloat16)  # (T, hd)
        kh = k[:, lo:lo + hd].astype(jnp.bfloat16)            # (S, hd)
        vh = v[:, lo:lo + hd].astype(jnp.bfloat16)            # (S, hd)
        s = jax.lax.dot_general(qh, kh, (((1,), (1,)), ((), ())),
                                preferred_element_type=jnp.float32)  # (T, S)
        m = jnp.max(s, axis=-1, keepdims=True)
        p = jnp.exp(s - m)
        denom = jnp.sum(p, axis=-1, keepdims=True)
        ctx = jax.lax.dot_general(p.astype(jnp.bfloat16), vh,
                                  (((1,), (0,)), ((), ())),
                                  preferred_element_type=jnp.float32)  # (T, hd)
        # normalize the small (T, hd) context, not the (T, S) prob matrix;
        # approx reciprocal runs on the EUP slot.
        ctx = ctx * pl.reciprocal(denom, approx=True)
        # out_proj folded in per head -> lane-dense (T, D) accumulation; the
        # head-interleave transpose is never materialised.
        acc = acc + jnp.dot(ctx.astype(jnp.bfloat16), wo_ref[lo:lo + hd, :],
                            preferred_element_type=jnp.float32)

    h1 = res_ref[...] + acc + bo_ref[...]          # residual (eval-mode dropout)
    mu = jnp.mean(h1, axis=-1, keepdims=True)
    var = jnp.mean(jnp.square(h1 - mu), axis=-1, keepdims=True)
    o_ref[...] = (h1 - mu) * jax.lax.rsqrt(var + 1e-5) * g_ref[...] + be_ref[...]


def attn_out_ln(q, k, v, res, wo, bo, g1, be1, *, nhead, scale):
    B, T, D = q.shape
    blk = pl.BlockSpec((None, T, D), lambda b: (b, 0, 0))   # leading dim squeezed
    wsp = pl.BlockSpec((D, D), lambda b: (0, 0))
    vsp = pl.BlockSpec((1, D), lambda b: (0, 0))
    kern = functools.partial(_attn_out_ln_kernel, nhead=nhead, scale=scale)
    cost = pl.CostEstimate(
        flops=int(B * (4 * T * T * D + 2 * T * D * D)),
        transcendentals=int(B * nhead * T * T),
        bytes_accessed=int(5 * B * T * D * 4 + D * D * 2))
    return pl.pallas_call(
        kern,
        grid=(B,),
        out_shape=jax.ShapeDtypeStruct((B, T, D), jnp.float32),
        in_specs=[blk, blk, blk, blk, wsp, vsp, vsp, vsp],
        out_specs=blk,
        compiler_params=pltpu.CompilerParams(
            dimension_semantics=("parallel",),
            vmem_limit_bytes=_VMEM_LIMIT),
        cost_estimate=cost,
    )(q, k, v, res, wo, bo, g1, be1)


# ---------------------------------------------------------------------------
# Kernel 3: FFN (linear1 -> ReLU -> linear2) + residual + LayerNorm2
# ---------------------------------------------------------------------------
# TODO(synk): for very large d_model (>~1k) on v7x (64 MiB VMEM), K-tile the
# 4*d_model hidden axis with an f32 accumulator instead of resident weights.
def _ffn_res_ln_kernel(x_ref, w1_ref, b1_ref, w2_ref, b2_ref, g_ref, be_ref,
                       o_ref):
    x = x_ref[...]                                            # (tn, D) f32
    h = (jnp.dot(x.astype(jnp.bfloat16), w1_ref[...],
                 preferred_element_type=jnp.float32) + b1_ref[...])
    h = jnp.maximum(h, 0.0)
    y = (jnp.dot(h.astype(jnp.bfloat16), w2_ref[...],
                 preferred_element_type=jnp.float32) + b2_ref[...])
    z = x + y
    mu = jnp.mean(z, axis=-1, keepdims=True)
    var = jnp.mean(jnp.square(z - mu), axis=-1, keepdims=True)
    o_ref[...] = (z - mu) * jax.lax.rsqrt(var + 1e-5) * g_ref[...] + be_ref[...]


def ffn_res_ln(x, w1, b1, w2, b2, g2, be2, *, tile_n):
    N, D = x.shape
    Dh = w1.shape[1]
    row = pl.BlockSpec((tile_n, D), lambda i: (i, 0))
    cost = pl.CostEstimate(flops=int(4 * N * D * Dh), transcendentals=0,
                           bytes_accessed=int(2 * N * D * 4 + 2 * D * Dh * 2))
    return pl.pallas_call(
        _ffn_res_ln_kernel,
        grid=(pl.cdiv(N, tile_n),),
        out_shape=jax.ShapeDtypeStruct((N, D), jnp.float32),
        in_specs=[row,
                  pl.BlockSpec((D, Dh), lambda i: (0, 0)),
                  pl.BlockSpec((1, Dh), lambda i: (0, 0)),
                  pl.BlockSpec((Dh, D), lambda i: (0, 0)),
                  pl.BlockSpec((1, D), lambda i: (0, 0)),
                  pl.BlockSpec((1, D), lambda i: (0, 0)),
                  pl.BlockSpec((1, D), lambda i: (0, 0))],
        out_specs=row,
        compiler_params=pltpu.CompilerParams(
            dimension_semantics=("parallel",),
            vmem_limit_bytes=_VMEM_LIMIT),
        cost_estimate=cost,
    )(x, w1, b1, w2, b2, g2, be2)


# ---------------------------------------------------------------------------
# Full forward (glue in plain JAX, hot paths in Pallas)
# ---------------------------------------------------------------------------
def attention_layer_forward(src, tar, params, nhead):
    """src, tar: (B, d_model, T).  Returns (T, B, d_model), like the module."""
    B, d_model, T = src.shape
    assert tar.shape == (B, d_model, T), "src/tar must share (B, d_model, T)"
    assert d_model % nhead == 0
    hd = d_model // nhead
    scale = 1.0 / float(hd) ** 0.5

    # (B, D, T) -> (B, T, D): rows ordered (batch, time) so per-batch row
    # blocks are contiguous and the attention grid needs no extra transposes.
    src_btd = jnp.transpose(src, (0, 2, 1))
    tar_btd = jnp.transpose(tar, (0, 2, 1))
    N = B * T
    src2d = src_btd.reshape(N, d_model)
    tar2d = tar_btd.reshape(N, d_model)

    # Row-tile size: full N for small problems, 256 rows otherwise (keeps
    # VMEM bounded independent of B*T while enabling double-buffering).
    tile_n = N if N <= 256 else 256

    bf = lambda w: w.astype(jnp.bfloat16)   # bf16 weights, f32 accumulation

    # query = tar, key = value = src (cross-attention, as in the module)
    q, k, v = qkv_proj(tar2d, src2d,
                       bf(params["wq"]), params["bq"],
                       bf(params["wk"]), params["bk"],
                       bf(params["wv"]), params["bv"],
                       tile_n=tile_n)

    # TODO(synk): Dropout layers (attention-prob dropout, dropout, dropout1,
    # dropout2) are eval-mode identities here; no RNG dropout applied.
    x1 = attn_out_ln(q.reshape(B, T, d_model),
                     k.reshape(B, T, d_model),
                     v.reshape(B, T, d_model),
                     src_btd,
                     bf(params["wo"]), params["bo"],
                     params["g1"], params["be1"],
                     nhead=nhead, scale=scale)

    x2 = ffn_res_ln(x1.reshape(N, d_model),
                    bf(params["w1"]), params["b1"],
                    bf(params["w2"]), params["b2"],
                    params["g2"], params["be2"],
                    tile_n=tile_n)

    # (B, T, D) -> (T, B, D), matching the PyTorch module output layout.
    return jnp.transpose(x2.reshape(B, T, d_model), (1, 0, 2))


# ---------------------------------------------------------------------------
# Pure-JAX reference with matching mixed precision (bf16 matmuls, f32 stats)
# ---------------------------------------------------------------------------
def reference_forward(src, tar, params, nhead):
    B, d_model, T = src.shape
    hd = d_model // nhead
    scale = 1.0 / float(hd) ** 0.5
    src_p = jnp.transpose(src, (2, 0, 1)).reshape(T * B, d_model)
    tar_p = jnp.transpose(tar, (2, 0, 1)).reshape(T * B, d_model)

    def mm(a, b):
        return jnp.dot(a.astype(jnp.bfloat16), b.astype(jnp.bfloat16),
                       preferred_element_type=jnp.float32)

    q = mm(tar_p, params["wq"]) + params["bq"]
    k = mm(src_p, params["wk"]) + params["bk"]
    v = mm(src_p, params["wv"]) + params["bv"]

    def heads(x):
        return jnp.transpose(x.reshape(T, B, nhead, hd), (1, 2, 0, 3))

    qh, kh, vh = heads(q), heads(k), heads(v)
    s = jnp.einsum("bhtd,bhsd->bhts",
                   (qh * scale).astype(jnp.bfloat16), kh.astype(jnp.bfloat16),
                   preferred_element_type=jnp.float32)
    p = jax.nn.softmax(s, axis=-1)
    oh = jnp.einsum("bhts,bhsd->bhtd",
                    p.astype(jnp.bfloat16), vh.astype(jnp.bfloat16),
                    preferred_element_type=jnp.float32)
    o = jnp.transpose(oh, (2, 0, 1, 3)).reshape(T * B, d_model)

    def ln(x, g, b):
        mu = jnp.mean(x, axis=-1, keepdims=True)
        var = jnp.mean(jnp.square(x - mu), axis=-1, keepdims=True)
        return (x - mu) * jax.lax.rsqrt(var + 1e-5) * g + b

    x1 = ln(src_p + (mm(o, params["wo"]) + params["bo"]),
            params["g1"], params["be1"])
    h = jnp.maximum(mm(x1, params["w1"]) + params["b1"], 0.0)
    x2 = ln(x1 + (mm(h, params["w2"]) + params["b2"]),
            params["g2"], params["be2"])
    return x2.reshape(T, B, d_model)


# ---------------------------------------------------------------------------
# Deterministic parameter construction
# ---------------------------------------------------------------------------
def make_params(key, d_model):
    ks = jax.random.split(key, 12)
    scl = 0.1
    d4 = d_model * 4
    return {
        # MultiheadAttention in_proj split into q/k/v (stored as (d_in, d_out))
        "wq": scl * jax.random.normal(ks[0], (d_model, d_model), jnp.float32),
        "bq": scl * jax.random.normal(ks[1], (1, d_model), jnp.float32),
        "wk": scl * jax.random.normal(ks[2], (d_model, d_model), jnp.float32),
        "bk": scl * jax.random.normal(ks[3], (1, d_model), jnp.float32),
        "wv": scl * jax.random.normal(ks[4], (d_model, d_model), jnp.float32),
        "bv": scl * jax.random.normal(ks[5], (1, d_model), jnp.float32),
        # out_proj
        "wo": scl * jax.random.normal(ks[6], (d_model, d_model), jnp.float32),
        "bo": scl * jax.random.normal(ks[7], (1, d_model), jnp.float32),
        # FFN
        "w1": scl * jax.random.normal(ks[8], (d_model, d4), jnp.float32),
        "b1": scl * jax.random.normal(ks[9], (1, d4), jnp.float32),
        "w2": scl * jax.random.normal(ks[10], (d4, d_model), jnp.float32),
        "b2": scl * jax.random.normal(ks[11], (1, d_model), jnp.float32),
        # LayerNorms (PyTorch default init)
        "g1": jnp.ones((1, d_model), jnp.float32),
        "be1": jnp.zeros((1, d_model), jnp.float32),
        "g2": jnp.ones((1, d_model), jnp.float32),
        "be2": jnp.zeros((1, d_model), jnp.float32),
    }


if __name__ == "__main__":
    B, d_model, T, nhead = 2, 32, 8, 4

    key = jax.random.PRNGKey(0)
    k_par, k_src, k_tar = jax.random.split(key, 3)
    params = make_params(k_par, d_model)
    src = jax.random.normal(k_src, (B, d_model, T), jnp.float32)
    tar = jax.random.normal(k_tar, (B, d_model, T), jnp.float32)

    fwd = jax.jit(attention_layer_forward, static_argnums=(3,))
    out = jax.block_until_ready(fwd(src, tar, params, nhead))

    ref = jax.block_until_ready(reference_forward(src, tar, params, nhead))
    assert out.shape == (T, B, d_model)
    assert jnp.allclose(out, ref, rtol=2e-2, atol=2e-2), "mismatch vs JAX reference"

    print("KERNEL_OK")
</pallas_src>

<mosaic_0001>
module attributes {stable_mosaic.version = 11 : i64} {
  func.func @_qkv_kernel(%arg0: i32, %arg1: memref<16x32xf32, #tpu.memory_space<vmem>>, %arg2: memref<16x32xf32, #tpu.memory_space<vmem>>, %arg3: memref<32x32xbf16, #tpu.memory_space<vmem>>, %arg4: memref<1x32xf32, #tpu.memory_space<vmem>>, %arg5: memref<32x32xbf16, #tpu.memory_space<vmem>>, %arg6: memref<1x32xf32, #tpu.memory_space<vmem>>, %arg7: memref<32x32xbf16, #tpu.memory_space<vmem>>, %arg8: memref<1x32xf32, #tpu.memory_space<vmem>>, %arg9: memref<16x32xf32, #tpu.memory_space<vmem>>, %arg10: memref<16x32xf32, #tpu.memory_space<vmem>>, %arg11: memref<16x32xf32, #tpu.memory_space<vmem>>) attributes {dimension_semantics = [#tpu.dimension_semantics<parallel>], iteration_bounds = array<i64: 1>, scalar_prefetch = 0 : i64, scratch_operands = 0 : i64, tpu.core_type = #tpu.core_type<tc>, window_params = [{transform_indices = @transform_0, window_bounds = array<i64: 16, 32>}, {transform_indices = @transform_1, window_bounds = array<i64: 16, 32>}, {pipeline_mode = #tpu.pipeline_mode<synchronous>, transform_indices = @transform_2, window_bounds = array<i64: 32, 32>}, {pipeline_mode = #tpu.pipeline_mode<synchronous>, transform_indices = @transform_3, window_bounds = array<i64: 1, 32>}, {pipeline_mode = #tpu.pipeline_mode<synchronous>, transform_indices = @transform_4, window_bounds = array<i64: 32, 32>}, {pipeline_mode = #tpu.pipeline_mode<synchronous>, transform_indices = @transform_5, window_bounds = array<i64: 1, 32>}, {pipeline_mode = #tpu.pipeline_mode<synchronous>, transform_indices = @transform_6, window_bounds = array<i64: 32, 32>}, {pipeline_mode = #tpu.pipeline_mode<synchronous>, transform_indices = @transform_7, window_bounds = array<i64: 1, 32>}, {transform_indices = @transform_8, window_bounds = array<i64: 16, 32>}, {transform_indices = @transform_9, window_bounds = array<i64: 16, 32>}, {transform_indices = @transform_10, window_bounds = array<i64: 16, 32>}]} {
    %c0 = arith.constant 0 : index
    %c0_0 = arith.constant 0 : index
    %0 = vector.load %arg1[%c0, %c0_0] : memref<16x32xf32, #tpu.memory_space<vmem>>, vector<16x32xf32>
    %1 = arith.truncf %0 : vector<16x32xf32> to vector<16x32xbf16>
    %c0_1 = arith.constant 0 : index
    %c0_2 = arith.constant 0 : index
    %2 = vector.load %arg2[%c0_1, %c0_2] : memref<16x32xf32, #tpu.memory_space<vmem>>, vector<16x32xf32>
    %3 = arith.truncf %2 : vector<16x32xf32> to vector<16x32xbf16>
    %c0_3 = arith.constant 0 : index
    %c0_4 = arith.constant 0 : index
    %4 = vector.load %arg3[%c0_3, %c0_4] : memref<32x32xbf16, #tpu.memory_space<vmem>>, vector<32x32xbf16>
    %cst = arith.constant dense<0.000000e+00> : vector<16x32xf32>
    %5 = tpu.matmul %1, %4, %cst {dimension_numbers = #tpu.dot_dimension_numbers<[1], [0], [0], [1], [0, 0, 1, 1], [], []>} : vector<16x32xbf16>, vector<32x32xbf16>, vector<16x32xf32> -> vector<16x32xf32>
    %c0_5 = arith.constant 0 : index
    %c0_6 = arith.constant 0 : index
    %6 = vector.load %arg4[%c0_5, %c0_6] : memref<1x32xf32, #tpu.memory_space<vmem>>, vector<1x32xf32>
    %7 = vector.broadcast %6 : vector<1x32xf32> to vector<16x32xf32>
    %8 = arith.addf %5, %7 : vector<16x32xf32>
    %c0_7 = arith.constant 0 : index
    %c0_8 = arith.constant 0 : index
    %9 = vector.load %arg9[%c0_7, %c0_8] : memref<16x32xf32, #tpu.memory_space<vmem>>, vector<16x32xf32>
    tpu.vector_store %arg9[%c0_7, %c0_8], %8 {strides = array<i32>} : memref<16x32xf32, #tpu.memory_space<vmem>>, vector<16x32xf32>,
    %c0_9 = arith.constant 0 : index
    %c0_10 = arith.constant 0 : index
    %10 = vector.load %arg5[%c0_9, %c0_10] : memref<32x32xbf16, #tpu.memory_space<vmem>>, vector<32x32xbf16>
    %cst_11 = arith.constant dense<0.000000e+00> : vector<16x32xf32>
    %11 = tpu.matmul %3, %10, %cst_11 {dimension_numbers = #tpu.dot_dimension_numbers<[1], [0], [0], [1], [0, 0, 1, 1], [], []>} : vector<16x32xbf16>, vector<32x32xbf16>, vector<16x32xf32> -> vector<16x32xf32>
    %c0_12 = arith.constant 0 : index
    %c0_13 = arith.constant 0 : index
    %12 = vector.load %arg6[%c0_12, %c0_13] : memref<1x32xf32, #tpu.memory_space<vmem>>, vector<1x32xf32>
    %13 = vector.broadcast %12 : vector<1x32xf32> to vector<16x32xf32>
    %14 = arith.addf %11, %13 : vector<16x32xf32>
    %c0_14 = arith.constant 0 : index
    %c0_15 = arith.constant 0 : index
    %15 = vector.load %arg10[%c0_14, %c0_15] : memref<16x32xf32, #tpu.memory_space<vmem>>, vector<16x32xf32>
    tpu.vector_store %arg10[%c0_14, %c0_15], %14 {strides = array<i32>} : memref<16x32xf32, #tpu.memory_space<vmem>>, vector<16x32xf32>,
    %c0_16 = arith.constant 0 : index
    %c0_17 = arith.constant 0 : index
    %16 = vector.load %arg7[%c0_16, %c0_17] : memref<32x32xbf16, #tpu.memory_space<vmem>>, vector<32x32xbf16>
    %cst_18 = arith.constant dense<0.000000e+00> : vector<16x32xf32>
    %17 = tpu.matmul %3, %16, %cst_18 {dimension_numbers = #tpu.dot_dimension_numbers<[1], [0], [0], [1], [0, 0, 1, 1], [], []>} : vector<16x32xbf16>, vector<32x32xbf16>, vector<16x32xf32> -> vector<16x32xf32>
    %c0_19 = arith.constant 0 : index
    %c0_20 = arith.constant 0 : index
    %18 = vector.load %arg8[%c0_19, %c0_20] : memref<1x32xf32, #tpu.memory_space<vmem>>, vector<1x32xf32>
    %19 = vector.broadcast %18 : vector<1x32xf32> to vector<16x32xf32>
    %20 = arith.addf %17, %19 : vector<16x32xf32>
    %c0_21 = arith.constant 0 : index
    %c0_22 = arith.constant 0 : index
    %21 = vector.load %arg11[%c0_21, %c0_22] : memref<16x32xf32, #tpu.memory_space<vmem>>, vector<16x32xf32>
    tpu.vector_store %arg11[%c0_21, %c0_22], %20 {strides = array<i32>} : memref<16x32xf32, #tpu.memory_space<vmem>>, vector<16x32xf32>,
    return
  }
  func.func @transform_0(%arg0: i32) -> (i32, i32) {
    %c0_i32 = arith.constant 0 : i32
    %c0_i32_0 = arith.constant 0 : i32
    return %arg0, %c0_i32 : i32, i32
  }
  func.func @transform_1(%arg0: i32) -> (i32, i32) {
    %c0_i32 = arith.constant 0 : i32
    %c0_i32_0 = arith.constant 0 : i32
    return %arg0, %c0_i32 : i32, i32
  }
  func.func @transform_2(%arg0: i32) -> (i32, i32) {
    %c0_i32 = arith.constant 0 : i32
    %c0_i32_0 = arith.constant 0 : i32
    %c0_i32_1 = arith.constant 0 : i32
    return %c0_i32, %c0_i32_0 : i32, i32
  }
  func.func @transform_3(%arg0: i32) -> (i32, i32) {
    %c0_i32 = arith.constant 0 : i32
    %c0_i32_0 = arith.constant 0 : i32
    %c0_i32_1 = arith.constant 0 : i32
    return %c0_i32, %c0_i32_0 : i32, i32
  }
  func.func @transform_4(%arg0: i32) -> (i32, i32) {
    %c0_i32 = arith.constant 0 : i32
    %c0_i32_0 = arith.constant 0 : i32
    %c0_i32_1 = arith.constant 0 : i32
    return %c0_i32, %c0_i32_0 : i32, i32
  }
  func.func @transform_5(%arg0: i32) -> (i32, i32) {
    %c0_i32 = arith.constant 0 : i32
    %c0_i32_0 = arith.constant 0 : i32
    %c0_i32_1 = arith.constant 0 : i32
    return %c0_i32, %c0_i32_0 : i32, i32
  }
  func.func @transform_6(%arg0: i32) -> (i32, i32) {
    %c0_i32 = arith.constant 0 : i32
    %c0_i32_0 = arith.constant 0 : i32
    %c0_i32_1 = arith.constant 0 : i32
    return %c0_i32, %c0_i32_0 : i32, i32
  }
  func.func @transform_7(%arg0: i32) -> (i32, i32) {
    %c0_i32 = arith.constant 0 : i32
    %c0_i32_0 = arith.constant 0 : i32
    %c0_i32_1 = arith.constant 0 : i32
    return %c0_i32, %c0_i32_0 : i32, i32
  }
  func.func @transform_8(%arg0: i32) -> (i32, i32) {
    %c0_i32 = arith.constant 0 : i32
    %c0_i32_0 = arith.constant 0 : i32
    return %arg0, %c0_i32 : i32, i32
  }
  func.func @transform_9(%arg0: i32) -> (i32, i32) {
    %c0_i32 = arith.constant 0 : i32
    %c0_i32_0 = arith.constant 0 : i32
    return %arg0, %c0_i32 : i32, i32
  }
  func.func @transform_10(%arg0: i32) -> (i32, i32) {
    %c0_i32 = arith.constant 0 : i32
    %c0_i32_0 = arith.constant 0 : i32
    return %arg0, %c0_i32 : i32, i32
  }
}

module attributes {stable_mosaic.version = 11 : i64} {
  func.func @_attn_out_ln_kernel(%arg0: i32, %arg1: memref<1x8x32xf32, #tpu.memory_space<vmem>>, %arg2: memref<1x8x32xf32, #tpu.memory_space<vmem>>, %arg3: memref<1x8x32xf32, #tpu.memory_space<vmem>>, %arg4: memref<1x8x32xf32, #tpu.memory_space<vmem>>, %arg5: memref<32x32xbf16, #tpu.memory_space<vmem>>, %arg6: memref<1x32xf32, #tpu.memory_space<vmem>>, %arg7: memref<1x32xf32, #tpu.memory_space<vmem>>, %arg8: memref<1x32xf32, #tpu.memory_space<vmem>>, %arg9: memref<1x8x32xf32, #tpu.memory_space<vmem>>) attributes {dimension_semantics = [#tpu.dimension_semantics<parallel>], iteration_bounds = array<i64: 2>, scalar_prefetch = 0 : i64, scratch_operands = 0 : i64, tpu.core_type = #tpu.core_type<tc>, window_params = [{transform_indices = @transform_0, window_bounds = array<i64: 1, 8, 32>}, {transform_indices = @transform_1, window_bounds = array<i64: 1, 8, 32>}, {transform_indices = @transform_2, window_bounds = array<i64: 1, 8, 32>}, {transform_indices = @transform_3, window_bounds = array<i64: 1, 8, 32>}, {pipeline_mode = #tpu.pipeline_mode<synchronous>, transform_indices = @transform_4, window_bounds = array<i64: 32, 32>}, {pipeline_mode = #tpu.pipeline_mode<synchronous>, transform_indices = @transform_5, window_bounds = array<i64: 1, 32>}, {pipeline_mode = #tpu.pipeline_mode<synchronous>, transform_indices = @transform_6, window_bounds = array<i64: 1, 32>}, {pipeline_mode = #tpu.pipeline_mode<synchronous>, transform_indices = @transform_7, window_bounds = array<i64: 1, 32>}, {transform_indices = @transform_8, window_bounds = array<i64: 1, 8, 32>}]} {
    %c0 = arith.constant 0 : index
    %c0_0 = arith.constant 0 : index
    %c0_1 = arith.constant 0 : index
    %0 = vector.load %arg1[%c0, %c0_0, %c0_1] : memref<1x8x32xf32, #tpu.memory_space<vmem>>, vector<1x8x32xf32>
    %1 = vector.shape_cast %0 : vector<1x8x32xf32> to vector<8x32xf32>
    %c0_2 = arith.constant 0 : index
    %c0_3 = arith.constant 0 : index
    %c0_4 = arith.constant 0 : index
    %2 = vector.load %arg2[%c0_2, %c0_3, %c0_4] : memref<1x8x32xf32, #tpu.memory_space<vmem>>, vector<1x8x32xf32>
    %3 = vector.shape_cast %2 : vector<1x8x32xf32> to vector<8x32xf32>
    %c0_5 = arith.constant 0 : index
    %c0_6 = arith.constant 0 : index
    %c0_7 = arith.constant 0 : index
    %4 = vector.load %arg3[%c0_5, %c0_6, %c0_7] : memref<1x8x32xf32, #tpu.memory_space<vmem>>, vector<1x8x32xf32>
    %5 = vector.shape_cast %4 : vector<1x8x32xf32> to vector<8x32xf32>
    %cst = arith.constant 0.000000e+00 : f32
    %6 = vector.broadcast %cst : f32 to vector<8x32xf32>
    %7 = vector.extract_strided_slice %1 {offsets = [0, 0], sizes = [8, 8], strides = [1, 1]} : vector<8x32xf32> to vector<8x8xf32>
    %cst_8 = arith.constant 0.353553385 : f32
    %8 = vector.broadcast %cst_8 : f32 to vector<8x8xf32>
    %9 = arith.mulf %7, %8 : vector<8x8xf32>
    %10 = arith.truncf %9 : vector<8x8xf32> to vector<8x8xbf16>
    %11 = vector.extract_strided_slice %3 {offsets = [0, 0], sizes = [8, 8], strides = [1, 1]} : vector<8x32xf32> to vector<8x8xf32>
    %12 = arith.truncf %11 : vector<8x8xf32> to vector<8x8xbf16>
    %13 = vector.extract_strided_slice %5 {offsets = [0, 0], sizes = [8, 8], strides = [1, 1]} : vector<8x32xf32> to vector<8x8xf32>
    %14 = arith.truncf %13 : vector<8x8xf32> to vector<8x8xbf16>
    %cst_9 = arith.constant dense<0.000000e+00> : vector<8x8xf32>
    %15 = tpu.matmul %10, %12, %cst_9 {dimension_numbers = #tpu.dot_dimension_numbers<[1], [1], [0], [0], [0, 0, 1, 0], [], []>} : vector<8x8xbf16>, vector<8x8xbf16>, vector<8x8xf32> -> vector<8x8xf32>
    %cst_10 = arith.constant dense<0xFF800000> : vector<8xf32>
    %16 = vector.multi_reduction <maximumf>, %15, %cst_10 [1] : vector<8x8xf32> to vector<8xf32>
    %17 = vector.shape_cast %16 : vector<8xf32> to vector<8x1xf32>
    %18 = vector.broadcast %17 : vector<8x1xf32> to vector<8x8xf32>
    %19 = arith.subf %15, %18 : vector<8x8xf32>
    %20 = math.exp %19 : vector<8x8xf32>
    %cst_11 = arith.constant dense<0.000000e+00> : vector<8xf32>
    %21 = vector.multi_reduction <add>, %20, %cst_11 [1] : vector<8x8xf32> to vector<8xf32>
    %22 = vector.shape_cast %21 : vector<8xf32> to vector<8x1xf32>
    %23 = arith.truncf %20 : vector<8x8xf32> to vector<8x8xbf16>
    %cst_12 = arith.constant dense<0.000000e+00> : vector<8x8xf32>
    %24 = tpu.matmul %23, %14, %cst_12 {dimension_numbers = #tpu.dot_dimension_numbers<[1], [0], [0], [1], [0, 0, 1, 1], [], []>} : vector<8x8xbf16>, vector<8x8xbf16>, vector<8x8xf32> -> vector<8x8xf32>
    %25 = tpu.reciprocal %22 {approx = true} : vector<8x1xf32> -> vector<8x1xf32>
    %26 = vector.broadcast %25 : vector<8x1xf32> to vector<8x8xf32>
    %27 = arith.mulf %24, %26 : vector<8x8xf32>
    %28 = arith.truncf %27 : vector<8x8xf32> to vector<8x8xbf16>
    %c0_13 = arith.constant 0 : index
    %c0_14 = arith.constant 0 : index
    %29 = vector.load %arg5[%c0_13, %c0_14] : memref<32x32xbf16, #tpu.memory_space<vmem>>, vector<8x32xbf16>
    %cst_15 = arith.constant dense<0.000000e+00> : vector<8x32xf32>
    %30 = tpu.matmul %28, %29, %cst_15 {dimension_numbers = #tpu.dot_dimension_numbers<[1], [0], [0], [1], [0, 0, 1, 1], [], []>} : vector<8x8xbf16>, vector<8x32xbf16>, vector<8x32xf32> -> vector<8x32xf32>
    %31 = arith.addf %6, %30 : vector<8x32xf32>
    %32 = vector.extract_strided_slice %1 {offsets = [0, 8], sizes = [8, 8], strides = [1, 1]} : vector<8x32xf32> to vector<8x8xf32>
    %cst_16 = arith.constant 0.353553385 : f32
    %33 = vector.broadcast %cst_16 : f32 to vector<8x8xf32>
    %34 = arith.mulf %32, %33 : vector<8x8xf32>
    %35 = arith.truncf %34 : vector<8x8xf32> to vector<8x8xbf16>
    %36 = vector.extract_strided_slice %3 {offsets = [0, 8], sizes = [8, 8], strides = [1, 1]} : vector<8x32xf32> to vector<8x8xf32>
    %37 = arith.truncf %36 : vector<8x8xf32> to vector<8x8xbf16>
    %38 = vector.extract_strided_slice %5 {offsets = [0, 8], sizes = [8, 8], strides = [1, 1]} : vector<8x32xf32> to vector<8x8xf32>
    %39 = arith.truncf %38 : vector<8x8xf32> to vector<8x8xbf16>
    %cst_17 = arith.constant dense<0.000000e+00> : vector<8x8xf32>
    %40 = tpu.matmul %35, %37, %cst_17 {dimension_numbers = #tpu.dot_dimension_numbers<[1], [1], [0], [0], [0, 0, 1, 0], [], []>} : vector<8x8xbf16>, vector<8x8xbf16>, vector<8x8xf32> -> vector<8x8xf32>
    %cst_18 = arith.constant dense<0xFF800000> : vector<8xf32>
    %41 = vector.multi_reduction <maximumf>, %40, %cst_18 [1] : vector<8x8xf32> to vector<8xf32>
    %42 = vector.shape_cast %41 : vector<8xf32> to vector<8x1xf32>
    %43 = vector.broadcast %42 : vector<8x1xf32> to vector<8x8xf32>
    %44 = arith.subf %40, %43 : vector<8x8xf32>
    %45 = math.exp %44 : vector<8x8xf32>
    %cst_19 = arith.constant dense<0.000000e+00> : vector<8xf32>
    %46 = vector.multi_reduction <add>, %45, %cst_19 [1] : vector<8x8xf32> to vector<8xf32>
    %47 = vector.shape_cast %46 : vector<8xf32> to vector<8x1xf32>
    %48 = arith.truncf %45 : vector<8x8xf32> to vector<8x8xbf16>
    %cst_20 = arith.constant dense<0.000000e+00> : vector<8x8xf32>
    %49 = tpu.matmul %48, %39, %cst_20 {dimension_numbers = #tpu.dot_dimension_numbers<[1], [0], [0], [1], [0, 0, 1, 1], [], []>} : vector<8x8xbf16>, vector<8x8xbf16>, vector<8x8xf32> -> vector<8x8xf32>
    %50 = tpu.reciprocal %47 {approx = true} : vector<8x1xf32> -> vector<8x1xf32>
    %51 = vector.broadcast %50 : vector<8x1xf32> to vector<8x8xf32>
    %52 = arith.mulf %49, %51 : vector<8x8xf32>
    %53 = arith.truncf %52 : vector<8x8xf32> to vector<8x8xbf16>
    %c8 = arith.constant 8 : index
    %c0_21 = arith.constant 0 : index
    %54 = vector.load %arg5[%c8, %c0_21] : memref<32x32xbf16, #tpu.memory_space<vmem>>, vector<8x32xbf16>
    %cst_22 = arith.constant dense<0.000000e+00> : vector<8x32xf32>
    %55 = tpu.matmul %53, %54, %cst_22 {dimension_numbers = #tpu.dot_dimension_numbers<[1], [0], [0], [1], [0, 0, 1, 1], [], []>} : vector<8x8xbf16>, vector<8x32xbf16>, vector<8x32xf32> -> vector<8x32xf32>
    %56 = arith.addf %31, %55 : vector<8x32xf32>
    %57 = vector.extract_strided_slice %1 {offsets = [0, 16], sizes = [8, 8], strides = [1, 1]} : vector<8x32xf32> to vector<8x8xf32>
    %cst_23 = arith.constant 0.353553385 : f32
    %58 = vector.broadcast %cst_23 : f32 to vector<8x8xf32>
    %59 = arith.mulf %57, %58 : vector<8x8xf32>
    %60 = arith.truncf %59 : vector<8x8xf32> to vector<8x8xbf16>
    %61 = vector.extract_strided_slice %3 {offsets = [0, 16], sizes = [8, 8], strides = [1, 1]} : vector<8x32xf32> to vector<8x8xf32>
    %62 = arith.truncf %61 : vector<8x8xf32> to vector<8x8xbf16>
    %63 = vector.extract_strided_slice %5 {offsets = [0, 16], sizes = [8, 8], strides = [1, 1]} : vector<8x32xf32> to vector<8x8xf32>
    %64 = arith.truncf %63 : vector<8x8xf32> to vector<8x8xbf16>
    %cst_24 = arith.constant dense<0.000000e+00> : vector<8x8xf32>
    %65 = tpu.matmul %60, %62, %cst_24 {dimension_numbers = #tpu.dot_dimension_numbers<[1], [1], [0], [0], [0, 0, 1, 0], [], []>} : vector<8x8xbf16>, vector<8x8xbf16>, vector<8x8xf32> -> vector<8x8xf32>
    %cst_25 = arith.constant dense<0xFF800000> : vector<8xf32>
    %66 = vector.multi_reduction <maximumf>, %65, %cst_25 [1] : vector<8x8xf32> to vector<8xf32>
    %67 = vector.shape_cast %66 : vector<8xf32> to vector<8x1xf32>
    %68 = vector.broadcast %67 : vector<8x1xf32> to vector<8x8xf32>
    %69 = arith.subf %65, %68 : vector<8x8xf32>
    %70 = math.exp %69 : vector<8x8xf32>
    %cst_26 = arith.constant dense<0.000000e+00> : vector<8xf32>
    %71 = vector.multi_reduction <add>, %70, %cst_26 [1] : vector<8x8xf32> to vector<8xf32>
    %72 = vector.shape_cast %71 : vector<8xf32> to vector<8x1xf32>
    %73 = arith.truncf %70 : vector<8x8xf32> to vector<8x8xbf16>
    %cst_27 = arith.constant dense<0.000000e+00> : vector<8x8xf32>
    %74 = tpu.matmul %73, %64, %cst_27 {dimension_numbers = #tpu.dot_dimension_numbers<[1], [0], [0], [1], [0, 0, 1, 1], [], []>} : vector<8x8xbf16>, vector<8x8xbf16>, vector<8x8xf32> -> vector<8x8xf32>
    %75 = tpu.reciprocal %72 {approx = true} : vector<8x1xf32> -> vector<8x1xf32>
    %76 = vector.broadcast %75 : vector<8x1xf32> to vector<8x8xf32>
    %77 = arith.mulf %74, %76 : vector<8x8xf32>
    %78 = arith.truncf %77 : vector<8x8xf32> to vector<8x8xbf16>
    %c16 = arith.constant 16 : index
    %c0_28 = arith.constant 0 : index
    %79 = vector.load %arg5[%c16, %c0_28] : memref<32x32xbf16, #tpu.memory_space<vmem>>, vector<8x32xbf16>
    %cst_29 = arith.constant dense<0.000000e+00> : vector<8x32xf32>
    %80 = tpu.matmul %78, %79, %cst_29 {dimension_numbers = #tpu.dot_dimension_numbers<[1], [0], [0], [1], [0, 0, 1, 1], [], []>} : vector<8x8xbf16>, vector<8x32xbf16>, vector<8x32xf32> -> vector<8x32xf32>
    %81 = arith.addf %56, %80 : vector<8x32xf32>
    %82 = vector.extract_strided_slice %1 {offsets = [0, 24], sizes = [8, 8], strides = [1, 1]} : vector<8x32xf32> to vector<8x8xf32>
    %cst_30 = arith.constant 0.353553385 : f32
    %83 = vector.broadcast %cst_30 : f32 to vector<8x8xf32>
    %84 = arith.mulf %82, %83 : vector<8x8xf32>
    %85 = arith.truncf %84 : vector<8x8xf32> to vector<8x8xbf16>
    %86 = vector.extract_strided_slice %3 {offsets = [0, 24], sizes = [8, 8], strides = [1, 1]} : vector<8x32xf32> to vector<8x8xf32>
    %87 = arith.truncf %86 : vector<8x8xf32> to vector<8x8xbf16>
    %88 = vector.extract_strided_slice %5 {offsets = [0, 24], sizes = [8, 8], strides = [1, 1]} : vector<8x32xf32> to vector<8x8xf32>
    %89 = arith.truncf %88 : vector<8x8xf32> to vector<8x8xbf16>
    %cst_31 = arith.constant dense<0.000000e+00> : vector<8x8xf32>
    %90 = tpu.matmul %85, %87, %cst_31 {dimension_numbers = #tpu.dot_dimension_numbers<[1], [1], [0], [0], [0, 0, 1, 0], [], []>} : vector<8x8xbf16>, vector<8x8xbf16>, vector<8x8xf32> -> vector<8x8xf32>
    %cst_32 = arith.constant dense<0xFF800000> : vector<8xf32>
    %91 = vector.multi_reduction <maximumf>, %90, %cst_32 [1] : vector<8x8xf32> to vector<8xf32>
    %92 = vector.shape_cast %91 : vector<8xf32> to vector<8x1xf32>
    %93 = vector.broadcast %92 : vector<8x1xf32> to vector<8x8xf32>
    %94 = arith.subf %90, %93 : vector<8x8xf32>
    %95 = math.exp %94 : vector<8x8xf32>
    %cst_33 = arith.constant dense<0.000000e+00> : vector<8xf32>
    %96 = vector.multi_reduction <add>, %95, %cst_33 [1] : vector<8x8xf32> to vector<8xf32>
    %97 = vector.shape_cast %96 : vector<8xf32> to vector<8x1xf32>
    %98 = arith.truncf %95 : vector<8x8xf32> to vector<8x8xbf16>
    %cst_34 = arith.constant dense<0.000000e+00> : vector<8x8xf32>
    %99 = tpu.matmul %98, %89, %cst_34 {dimension_numbers = #tpu.dot_dimension_numbers<[1], [0], [0], [1], [0, 0, 1, 1], [], []>} : vector<8x8xbf16>, vector<8x8xbf16>, vector<8x8xf32> -> vector<8x8xf32>
    %100 = tpu.reciprocal %97 {approx = true} : vector<8x1xf32> -> vector<8x1xf32>
    %101 = vector.broadcast %100 : vector<8x1xf32> to vector<8x8xf32>
    %102 = arith.mulf %99, %101 : vector<8x8xf32>
    %103 = arith.truncf %102 : vector<8x8xf32> to vector<8x8xbf16>
    %c24 = arith.constant 24 : index
    %c0_35 = arith.constant 0 : index
    %104 = vector.load %arg5[%c24, %c0_35] : memref<32x32xbf16, #tpu.memory_space<vmem>>, vector<8x32xbf16>
    %cst_36 = arith.constant dense<0.000000e+00> : vector<8x32xf32>
    %105 = tpu.matmul %103, %104, %cst_36 {dimension_numbers = #tpu.dot_dimension_numbers<[1], [0], [0], [1], [0, 0, 1, 1], [], []>} : vector<8x8xbf16>, vector<8x32xbf16>, vector<8x32xf32> -> vector<8x32xf32>
    %106 = arith.addf %81, %105 : vector<8x32xf32>
    %c0_37 = arith.constant 0 : index
    %c0_38 = arith.constant 0 : index
    %c0_39 = arith.constant 0 : index
    %107 = vector.load %arg4[%c0_37, %c0_38, %c0_39] : memref<1x8x32xf32, #tpu.memory_space<vmem>>, vector<1x8x32xf32>
    %108 = vector.shape_cast %107 : vector<1x8x32xf32> to vector<8x32xf32>
    %109 = arith.addf %108, %106 : vector<8x32xf32>
    %c0_40 = arith.constant 0 : index
    %c0_41 = arith.constant 0 : index
    %110 = vector.load %arg6[%c0_40, %c0_41] : memref<1x32xf32, #tpu.memory_space<vmem>>, vector<1x32xf32>
    %111 = vector.broadcast %110 : vector<1x32xf32> to vector<8x32xf32>
    %112 = arith.addf %109, %111 : vector<8x32xf32>
    %cst_42 = arith.constant dense<0.000000e+00> : vector<8xf32>
    %113 = vector.multi_reduction <add>, %112, %cst_42 [1] : vector<8x32xf32> to vector<8xf32>
    %114 = vector.shape_cast %113 : vector<8xf32> to vector<8x1xf32>
    %cst_43 = arith.constant 3.200000e+01 : f32
    %115 = vector.broadcast %cst_43 : f32 to vector<8x1xf32>
    %116 = arith.divf %114, %115 : vector<8x1xf32>
    %117 = vector.broadcast %116 : vector<8x1xf32> to vector<8x32xf32>
    %118 = arith.subf %112, %117 : vector<8x32xf32>
    %119 = arith.mulf %118, %118 : vector<8x32xf32>
    %cst_44 = arith.constant dense<0.000000e+00> : vector<8xf32>
    %120 = vector.multi_reduction <add>, %119, %cst_44 [1] : vector<8x32xf32> to vector<8xf32>
    %121 = vector.shape_cast %120 : vector<8xf32> to vector<8x1xf32>
    %cst_45 = arith.constant 3.200000e+01 : f32
    %122 = vector.broadcast %cst_45 : f32 to vector<8x1xf32>
    %123 = arith.divf %121, %122 : vector<8x1xf32>
    %124 = vector.broadcast %116 : vector<8x1xf32> to vector<8x32xf32>
    %125 = arith.subf %112, %124 : vector<8x32xf32>
    %cst_46 = arith.constant 9.99999974E-6 : f32
    %126 = vector.broadcast %cst_46 : f32 to vector<8x1xf32>
    %127 = arith.addf %123, %126 : vector<8x1xf32>
    %128 = math.rsqrt %127 : vector<8x1xf32>
    %129 = vector.broadcast %128 : vector<8x1xf32> to vector<8x32xf32>
    %130 = arith.mulf %125, %129 : vector<8x32xf32>
    %c0_47 = arith.constant 0 : index
    %c0_48 = arith.constant 0 : index
    %131 = vector.load %arg7[%c0_47, %c0_48] : memref<1x32xf32, #tpu.memory_space<vmem>>, vector<1x32xf32>
    %132 = vector.broadcast %131 : vector<1x32xf32> to vector<8x32xf32>
    %133 = arith.mulf %130, %132 : vector<8x32xf32>
    %c0_49 = arith.constant 0 : index
    %c0_50 = arith.constant 0 : index
    %134 = vector.load %arg8[%c0_49, %c0_50] : memref<1x32xf32, #tpu.memory_space<vmem>>, vector<1x32xf32>
    %135 = vector.broadcast %134 : vector<1x32xf32> to vector<8x32xf32>
    %136 = arith.addf %133, %135 : vector<8x32xf32>
    %c0_51 = arith.constant 0 : index
    %c0_52 = arith.constant 0 : index
    %c0_53 = arith.constant 0 : index
    %137 = vector.load %arg9[%c0_51, %c0_52, %c0_53] : memref<1x8x32xf32, #tpu.memory_space<vmem>>, vector<1x8x32xf32>
    %138 = vector.shape_cast %137 : vector<1x8x32xf32> to vector<8x32xf32>
    %139 = vector.shape_cast %136 : vector<8x32xf32> to vector<1x8x32xf32>
    tpu.vector_store %arg9[%c0_51, %c0_52, %c0_53], %139 {strides = array<i32>} : memref<1x8x32xf32, #tpu.memory_space<vmem>>, vector<1x8x32xf32>,
    return
  }
  func.func @transform_0(%arg0: i32) -> (i32, i32, i32) {
    %c0_i32 = arith.constant 0 : i32
    %c0_i32_0 = arith.constant 0 : i32
    %c0_i32_1 = arith.constant 0 : i32
    return %arg0, %c0_i32, %c0_i32_0 : i32, i32, i32
  }
  func.func @transform_1(%arg0: i32) -> (i32, i32, i32) {
    %c0_i32 = arith.constant 0 : i32
    %c0_i32_0 = arith.constant 0 : i32
    %c0_i32_1 = arith.constant 0 : i32
    return %arg0, %c0_i32, %c0_i32_0 : i32, i32, i32
  }
  func.func @transform_2(%arg0: i32) -> (i32, i32, i32) {
    %c0_i32 = arith.constant 0 : i32
    %c0_i32_0 = arith.constant 0 : i32
    %c0_i32_1 = arith.constant 0 : i32
    return %arg0, %c0_i32, %c0_i32_0 : i32, i32, i32
  }
  func.func @transform_3(%arg0: i32) -> (i32, i32, i32) {
    %c0_i32 = arith.constant 0 : i32
    %c0_i32_0 = arith.constant 0 : i32
    %c0_i32_1 = arith.constant 0 : i32
    return %arg0, %c0_i32, %c0_i32_0 : i32, i32, i32
  }
  func.func @transform_4(%arg0: i32) -> (i32, i32) {
    %c0_i32 = arith.constant 0 : i32
    %c0_i32_0 = arith.constant 0 : i32
    %c0_i32_1 = arith.constant 0 : i32
    return %c0_i32, %c0_i32_0 : i32, i32
  }
  func.func @transform_5(%arg0: i32) -> (i32, i32) {
    %c0_i32 = arith.constant 0 : i32
    %c0_i32_0 = arith.constant 0 : i32
    %c0_i32_1 = arith.constant 0 : i32
    return %c0_i32, %c0_i32_0 : i32, i32
  }
  func.func @transform_6(%arg0: i32) -> (i32, i32) {
    %c0_i32 = arith.constant 0 : i32
    %c0_i32_0 = arith.constant 0 : i32
    %c0_i32_1 = arith.constant 0 : i32
    return %c0_i32, %c0_i32_0 : i32, i32
  }
  func.func @transform_7(%arg0: i32) -> (i32, i32) {
    %c0_i32 = arith.constant 0 : i32
    %c0_i32_0 = arith.constant 0 : i32
    %c0_i32_1 = arith.constant 0 : i32
    return %c0_i32, %c0_i32_0 : i32, i32
  }
  func.func @transform_8(%arg0: i32) -> (i32, i32, i32) {
    %c0_i32 = arith.constant 0 : i32
    %c0_i32_0 = arith.constant 0 : i32
    %c0_i32_1 = arith.constant 0 : i32
    return %arg0, %c0_i32, %c0_i32_0 : i32, i32, i32
  }
}

module attributes {stable_mosaic.version = 11 : i64} {
  func.func @_ffn_res_ln_kernel(%arg0: i32, %arg1: memref<16x32xf32, #tpu.memory_space<vmem>>, %arg2: memref<32x128xbf16, #tpu.memory_space<vmem>>, %arg3: memref<1x128xf32, #tpu.memory_space<vmem>>, %arg4: memref<128x32xbf16, #tpu.memory_space<vmem>>, %arg5: memref<1x32xf32, #tpu.memory_space<vmem>>, %arg6: memref<1x32xf32, #tpu.memory_space<vmem>>, %arg7: memref<1x32xf32, #tpu.memory_space<vmem>>, %arg8: memref<16x32xf32, #tpu.memory_space<vmem>>) attributes {dimension_semantics = [#tpu.dimension_semantics<parallel>], iteration_bounds = array<i64: 1>, scalar_prefetch = 0 : i64, scratch_operands = 0 : i64, tpu.core_type = #tpu.core_type<tc>, window_params = [{transform_indices = @transform_0, window_bounds = array<i64: 16, 32>}, {pipeline_mode = #tpu.pipeline_mode<synchronous>, transform_indices = @transform_1, window_bounds = array<i64: 32, 128>}, {pipeline_mode = #tpu.pipeline_mode<synchronous>, transform_indices = @transform_2, window_bounds = array<i64: 1, 128>}, {pipeline_mode = #tpu.pipeline_mode<synchronous>, transform_indices = @transform_3, window_bounds = array<i64: 128, 32>}, {pipeline_mode = #tpu.pipeline_mode<synchronous>, transform_indices = @transform_4, window_bounds = array<i64: 1, 32>}, {pipeline_mode = #tpu.pipeline_mode<synchronous>, transform_indices = @transform_5, window_bounds = array<i64: 1, 32>}, {pipeline_mode = #tpu.pipeline_mode<synchronous>, transform_indices = @transform_6, window_bounds = array<i64: 1, 32>}, {transform_indices = @transform_7, window_bounds = array<i64: 16, 32>}]} {
    %c0 = arith.constant 0 : index
    %c0_0 = arith.constant 0 : index
    %0 = vector.load %arg1[%c0, %c0_0] : memref<16x32xf32, #tpu.memory_space<vmem>>, vector<16x32xf32>
    %1 = arith.truncf %0 : vector<16x32xf32> to vector<16x32xbf16>
    %c0_1 = arith.constant 0 : index
    %c0_2 = arith.constant 0 : index
    %2 = vector.load %arg2[%c0_1, %c0_2] : memref<32x128xbf16, #tpu.memory_space<vmem>>, vector<32x128xbf16>
    %cst = arith.constant dense<0.000000e+00> : vector<16x128xf32>
    %3 = tpu.matmul %1, %2, %cst {dimension_numbers = #tpu.dot_dimension_numbers<[1], [0], [0], [1], [0, 0, 1, 1], [], []>} : vector<16x32xbf16>, vector<32x128xbf16>, vector<16x128xf32> -> vector<16x128xf32>
    %c0_3 = arith.constant 0 : index
    %c0_4 = arith.constant 0 : index
    %4 = vector.load %arg3[%c0_3, %c0_4] : memref<1x128xf32, #tpu.memory_space<vmem>>, vector<1x128xf32>
    %5 = vector.broadcast %4 : vector<1x128xf32> to vector<16x128xf32>
    %6 = arith.addf %3, %5 : vector<16x128xf32>
    %cst_5 = arith.constant 0.000000e+00 : f32
    %7 = vector.broadcast %cst_5 : f32 to vector<16x128xf32>
    %8 = arith.maximumf %6, %7 : vector<16x128xf32>
    %9 = arith.truncf %8 : vector<16x128xf32> to vector<16x128xbf16>
    %c0_6 = arith.constant 0 : index
    %c0_7 = arith.constant 0 : index
    %10 = vector.load %arg4[%c0_6, %c0_7] : memref<128x32xbf16, #tpu.memory_space<vmem>>, vector<128x32xbf16>
    %cst_8 = arith.constant dense<0.000000e+00> : vector<16x32xf32>
    %11 = tpu.matmul %9, %10, %cst_8 {dimension_numbers = #tpu.dot_dimension_numbers<[1], [0], [0], [1], [0, 0, 1, 1], [], []>} : vector<16x128xbf16>, vector<128x32xbf16>, vector<16x32xf32> -> vector<16x32xf32>
    %c0_9 = arith.constant 0 : index
    %c0_10 = arith.constant 0 : index
    %12 = vector.load %arg5[%c0_9, %c0_10] : memref<1x32xf32, #tpu.memory_space<vmem>>, vector<1x32xf32>
    %13 = vector.broadcast %12 : vector<1x32xf32> to vector<16x32xf32>
    %14 = arith.addf %11, %13 : vector<16x32xf32>
    %15 = arith.addf %0, %14 : vector<16x32xf32>
    %cst_11 = arith.constant dense<0.000000e+00> : vector<16xf32>
    %16 = vector.multi_reduction <add>, %15, %cst_11 [1] : vector<16x32xf32> to vector<16xf32>
    %17 = vector.shape_cast %16 : vector<16xf32> to vector<16x1xf32>
    %cst_12 = arith.constant 3.200000e+01 : f32
    %18 = vector.broadcast %cst_12 : f32 to vector<16x1xf32>
    %19 = arith.divf %17, %18 : vector<16x1xf32>
    %20 = vector.broadcast %19 : vector<16x1xf32> to vector<16x32xf32>
    %21 = arith.subf %15, %20 : vector<16x32xf32>
    %22 = arith.mulf %21, %21 : vector<16x32xf32>
    %cst_13 = arith.constant dense<0.000000e+00> : vector<16xf32>
    %23 = vector.multi_reduction <add>, %22, %cst_13 [1] : vector<16x32xf32> to vector<16xf32>
    %24 = vector.shape_cast %23 : vector<16xf32> to vector<16x1xf32>
    %cst_14 = arith.constant 3.200000e+01 : f32
    %25 = vector.broadcast %cst_14 : f32 to vector<16x1xf32>
    %26 = arith.divf %24, %25 : vector<16x1xf32>
    %27 = vector.broadcast %19 : vector<16x1xf32> to vector<16x32xf32>
    %28 = arith.subf %15, %27 : vector<16x32xf32>
    %cst_15 = arith.constant 9.99999974E-6 : f32
    %29 = vector.broadcast %cst_15 : f32 to vector<16x1xf32>
    %30 = arith.addf %26, %29 : vector<16x1xf32>
    %31 = math.rsqrt %30 : vector<16x1xf32>
    %32 = vector.broadcast %31 : vector<16x1xf32> to vector<16x32xf32>
    %33 = arith.mulf %28, %32 : vector<16x32xf32>
    %c0_16 = arith.constant 0 : index
    %c0_17 = arith.constant 0 : index
    %34 = vector.load %arg6[%c0_16, %c0_17] : memref<1x32xf32, #tpu.memory_space<vmem>>, vector<1x32xf32>
    %35 = vector.broadcast %34 : vector<1x32xf32> to vector<16x32xf32>
    %36 = arith.mulf %33, %35 : vector<16x32xf32>
    %c0_18 = arith.constant 0 : index
    %c0_19 = arith.constant 0 : index
    %37 = vector.load %arg7[%c0_18, %c0_19] : memref<1x32xf32, #tpu.memory_space<vmem>>, vector<1x32xf32>
    %38 = vector.broadcast %37 : vector<1x32xf32> to vector<16x32xf32>
    %39 = arith.addf %36, %38 : vector<16x32xf32>
    %c0_20 = arith.constant 0 : index
    %c0_21 = arith.constant 0 : index
    %40 = vector.load %arg8[%c0_20, %c0_21] : memref<16x32xf32, #tpu.memory_space<vmem>>, vector<16x32xf32>
    tpu.vector_store %arg8[%c0_20, %c0_21], %39 {strides = array<i32>} : memref<16x32xf32, #tpu.memory_space<vmem>>, vector<16x32xf32>,
    return
  }
  func.func @transform_0(%arg0: i32) -> (i32, i32) {
    %c0_i32 = arith.constant 0 : i32
    %c0_i32_0 = arith.constant 0 : i32
    return %arg0, %c0_i32 : i32, i32
  }
  func.func @transform_1(%arg0: i32) -> (i32, i32) {
    %c0_i32 = arith.constant 0 : i32
    %c0_i32_0 = arith.constant 0 : i32
    %c0_i32_1 = arith.constant 0 : i32
    return %c0_i32, %c0_i32_0 : i32, i32
  }
  func.func @transform_2(%arg0: i32) -> (i32, i32) {
    %c0_i32 = arith.constant 0 : i32
    %c0_i32_0 = arith.constant 0 : i32
    %c0_i32_1 = arith.constant 0 : i32
    return %c0_i32, %c0_i32_0 : i32, i32
  }
  func.func @transform_3(%arg0: i32) -> (i32, i32) {
    %c0_i32 = arith.constant 0 : i32
    %c0_i32_0 = arith.constant 0 : i32
    %c0_i32_1 = arith.constant 0 : i32
    return %c0_i32, %c0_i32_0 : i32, i32
  }
  func.func @transform_4(%arg0: i32) -> (i32, i32) {
    %c0_i32 = arith.constant 0 : i32
    %c0_i32_0 = arith.constant 0 : i32
    %c0_i32_1 = arith.constant 0 : i32
    return %c0_i32, %c0_i32_0 : i32, i32
  }
  func.func @transform_5(%arg0: i32) -> (i32, i32) {
    %c0_i32 = arith.constant 0 : i32
    %c0_i32_0 = arith.constant 0 : i32
    %c0_i32_1 = arith.constant 0 : i32
    return %c0_i32, %c0_i32_0 : i32, i32
  }
  func.func @transform_6(%arg0: i32) -> (i32, i32) {
    %c0_i32 = arith.constant 0 : i32
    %c0_i32_0 = arith.constant 0 : i32
    %c0_i32_1 = arith.constant 0 : i32
    return %c0_i32, %c0_i32_0 : i32, i32
  }
  func.func @transform_7(%arg0: i32) -> (i32, i32) {
    %c0_i32 = arith.constant 0 : i32
    %c0_i32_0 = arith.constant 0 : i32
    return %arg0, %c0_i32 : i32, i32
  }
}

</mosaic_0001>

<llo_original>
// kernel: attention_layer_forward.3
$region0: #{attention_layer_forward.3}
  #allocation0 [shape = 'u32[]', space=smem, size = 0x4, offset = 0x4, fixed_abs, tag = 'smem constant byte address 0x4 - core index']
  #allocation1 [shape = 'u32[144,128]{1,0:T(1,128)}', space=vmem, size = 0x12000, scoped, tag = 'internal scratch']
  %s0 = inlined_call_operand.vmem [shape: f32[16,32], index: 0, kind: input, shape index: {}]
  %s1 = inlined_call_operand.vmem [shape: f32[16,32], index: 1, kind: input, shape index: {}]
  %s2 = inlined_call_operand.vmem [shape: bf16[32,32], index: 2, kind: input, shape index: {}]
  %s3 = inlined_call_operand.vmem [shape: f32[1,32], index: 3, kind: input, shape index: {}]
  %s4 = inlined_call_operand.vmem [shape: bf16[32,32], index: 4, kind: input, shape index: {}]
  %s5 = inlined_call_operand.vmem [shape: f32[1,32], index: 5, kind: input, shape index: {}]
  %s6 = inlined_call_operand.vmem [shape: bf16[32,32], index: 6, kind: input, shape index: {}]
  %s7 = inlined_call_operand.vmem [shape: f32[1,32], index: 7, kind: input, shape index: {}]
  %s8 = inlined_call_operand.vmem [shape: f32[16,32], index: 8, kind: output, shape index: {0}]
  %s9 = inlined_call_operand.vmem [shape: f32[16,32], index: 9, kind: output, shape index: {1}]
  %s10 = inlined_call_operand.vmem [shape: f32[16,32], index: 10, kind: output, shape index: {2}]
  %11 = xla_tuple %s8, %s9, %s10
  %s12 = sld [smem:[#allocation0]]
  $region58: #{attention_layer_forward.3} parent=0
    _
  %s14 = ssub.s32 1, %s12
  %s15 = scalar_select 0, %s14, %s12
  // Predicated region
  $region2: #{attention_layer_forward.3} parent=0 // pred_check
    _
  $region3: #{attention_layer_forward.3} parent=0 // pred_check_branch
    %17 = sbr.rel (0) target = $region5
  $region4: #{attention_layer_forward.3} parent=0 // pred_region
    _
  $region5: #{attention_layer_forward.3} parent=0 // pred_fallthru
    _
  // Predicated region
  $region6: #{attention_layer_forward.3} parent=0 // pred_check
    _
  $region7: #{attention_layer_forward.3} parent=0 // pred_check_branch
    %19 = sbr.rel (0) target = $region9
  $region8: #{attention_layer_forward.3} parent=0 // pred_region
    _
  $region9: #{attention_layer_forward.3} parent=0 // pred_fallthru
    _
  // Predicated region
  $region10: #{attention_layer_forward.3} parent=0 // pred_check
    _
  $region11: #{attention_layer_forward.3} parent=0 // pred_check_branch
    %21 = sbr.rel (0) target = $region13
  $region12: #{attention_layer_forward.3} parent=0 // pred_region
    _
  $region13: #{attention_layer_forward.3} parent=0 // pred_fallthru
    _
  // Predicated region
  $region14: #{attention_layer_forward.3} parent=0 // pred_check
    _
  $region15: #{attention_layer_forward.3} parent=0 // pred_check_branch
    %23 = sbr.rel (0) target = $region17
  $region16: #{attention_layer_forward.3} parent=0 // pred_region
    _
  $region17: #{attention_layer_forward.3} parent=0 // pred_fallthru
    _
  // Predicated region
  $region18: #{attention_layer_forward.3} parent=0 // pred_check
    _
  $region19: #{attention_layer_forward.3} parent=0 // pred_check_branch
    %25 = sbr.rel (0) target = $region21
  $region20: #{attention_layer_forward.3} parent=0 // pred_region
    _
  $region21: #{attention_layer_forward.3} parent=0 // pred_fallthru
    _
  // Predicated region
  $region22: #{attention_layer_forward.3} parent=0 // pred_check
    _
  $region23: #{attention_layer_forward.3} parent=0 // pred_check_branch
    %27 = sbr.rel (0) target = $region25
  $region24: #{attention_layer_forward.3} parent=0 // pred_region
    _
  $region25: #{attention_layer_forward.3} parent=0 // pred_fallthru
    _
  // Predicated region
  $region26: #{attention_layer_forward.3} parent=0 // pred_check
    _
  $region27: #{attention_layer_forward.3} parent=0 // pred_check_branch
    %29 = sbr.rel (0) target = $region29
  $region28: #{attention_layer_forward.3} parent=0 // pred_region
    _
  $region29: #{attention_layer_forward.3} parent=0 // pred_fallthru
    _
  // Predicated region
  $region30: #{attention_layer_forward.3} parent=0 // pred_check
    _
  $region31: #{attention_layer_forward.3} parent=0 // pred_check_branch
    %31 = sbr.rel (0) target = $region33
  $region32: #{attention_layer_forward.3} parent=0 // pred_region
    _
  $region33: #{attention_layer_forward.3} parent=0 // pred_fallthru
    _
  %v33 = vld [vmem:[%s0] sm:$0xff]
  %v34 = vld [vmem:[%s0 + $0x8] sm:$0xff]
  %v35 = vpack.c.bf16 %v34, %v33
  %v36 = vld [vmem:[%s1] sm:$0xff]
  %v37 = vld [vmem:[%s1 + $0x8] sm:$0xff]
  %v38 = vpack.c.bf16 %v37, %v36
  %v39 = vld [vmem:[%s2] sm:$0xf]
  %v40 = vld [vmem:[%s2 + $0x4] sm:$0xf]
  %v41 = vld [vmem:[%s2 + $0x8] sm:$0xf]
  %v42 = vld [vmem:[%s2 + $0xc] sm:$0xf]
  %v43 = vld [vmem:[%s3] sm:$0x1]
  %v45 = vlaneseq
  %v46 = vshrl.u32 %v45, 7
  %v47 = vsub.s32 0, %v46
  %v48 = vrot.slane %v43, %v47
  %v54 = vunpack.c.l.b16 %v39
  %v55 = vunpack.c.l.b16 %v40
  %v56 = vunpack.c.l.b16 %v41
  %v57 = vunpack.c.l.b16 %v42
  %v58 = vpack.c.b16 %v55, %v54
  %v59 = vpack.c.b16 %v57, %v56
  %vm62 = vcmask 261120
  %v64 = vsel %vm62, %v35, 0
  %66 = vmatprep.subr.bf16.mxu0 0
  %67 = vmatpush1.bf16.msra.mxu0 %v58
  %68 = vmatprep.subr.bf16.mxu0 0
  %69 = vmatpush1.bf16.msra.mxu0 %v59
  %70 = vmatprep.subr.bf16.mxu0 0
  %71 = vmatpush1.bf16.msra.mxu0 0
  %72 = vmatprep.subr.bf16.mxu0 0
  %73 = vmatpush1.bf16.msra.mxu0 0
  %74 = vmatprep.subr.bf16.mxu0 0
  %75 = vmatpush1.bf16.msra.mxu0 0
  %76 = vmatprep.subr.bf16.mxu0 0
  %77 = vmatpush1.bf16.msra.mxu0 0
  %78 = vmatprep.subr.bf16.mxu0 0
  %79 = vmatpush1.bf16.msra.mxu0 0
  %80 = vmatprep.subr.bf16.mxu0 0
  %81 = vmatpush1.bf16.msra.mxu0 0
  %82 = vmatprep.subr.bf16.mxu0 0
  %83 = vmatpush1.bf16.msra.mxu0 0
  %84 = vmatprep.subr.bf16.mxu0 0
  %85 = vmatpush1.bf16.msra.mxu0 0
  %86 = vmatprep.subr.bf16.mxu0 0
  %87 = vmatpush1.bf16.msra.mxu0 0
  %88 = vmatprep.subr.bf16.mxu0 0
  %89 = vmatpush1.bf16.msra.mxu0 0
  %90 = vmatprep.subr.bf16.mxu0 0
  %91 = vmatpush1.bf16.msra.mxu0 0
  %92 = vmatprep.subr.bf16.mxu0 0
  %93 = vmatpush1.bf16.msra.mxu0 0
  %94 = vmatprep.subr.bf16.mxu0 0
  %95 = vmatpush1.bf16.msra.mxu0 0
  %96 = vmatprep.subr.bf16.mxu0 0
  %97 = vmatpush1.bf16.msra.mxu0 0
  %98 = vmatprep.mubr.bf16.mxu0 0
  %99 = vmatmul.mubr.bf16.gmra.mrb[0].mxu0 %v64
  %v100 = vpop.f32.mrb[0].mxu0
  %v101 = vadd.f32 %v48, %v100
  %v102 = vpop.f32.mrb[0].mxu0
  %v103 = vpop.f32.mrb[0].mxu0
  %v104 = vadd.f32 %v48, %v103
  %v105 = vpop.f32.mrb[0].mxu0
  %106 = vdwg.mxu0
  %107 = vst.msk [vmem:[%s8] sm:$0xff] %vm62, %v101
  %108 = vst.msk [vmem:[%s8 + $0x8] sm:$0xff] %vm62, %v104
  %v109 = vld [vmem:[%s4] sm:$0xf]
  %v110 = vld [vmem:[%s4 + $0x4] sm:$0xf]
  %v111 = vld [vmem:[%s4 + $0x8] sm:$0xf]
  %v112 = vld [vmem:[%s4 + $0xc] sm:$0xf]
  %v113 = vld [vmem:[%s5] sm:$0x1]
  %v115 = vlaneseq
  %v116 = vshrl.u32 %v115, 7
  %v117 = vsub.s32 0, %v116
  %v118 = vrot.slane %v113, %v117
  %v124 = vunpack.c.l.b16 %v109
  %v125 = vunpack.c.l.b16 %v110
  %v126 = vunpack.c.l.b16 %v111
  %v127 = vunpack.c.l.b16 %v112
  %v128 = vpack.c.b16 %v125, %v124
  %v129 = vpack.c.b16 %v127, %v126
  %v133 = vsel %vm62, %v38, 0
  %135 = vmatprep.subr.bf16.mxu0 0
  %136 = vmatpush1.bf16.msra.mxu0 %v128
  %137 = vmatprep.subr.bf16.mxu0 0
  %138 = vmatpush1.bf16.msra.mxu0 %v129
  %139 = vmatprep.subr.bf16.mxu0 0
  %140 = vmatpush1.bf16.msra.mxu0 0
  %141 = vmatprep.subr.bf16.mxu0 0
  %142 = vmatpush1.bf16.msra.mxu0 0
  %143 = vmatprep.subr.bf16.mxu0 0
  %144 = vmatpush1.bf16.msra.mxu0 0
  %145 = vmatprep.subr.bf16.mxu0 0
  %146 = vmatpush1.bf16.msra.mxu0 0
  %147 = vmatprep.subr.bf16.mxu0 0
  %148 = vmatpush1.bf16.msra.mxu0 0
  %149 = vmatprep.subr.bf16.mxu0 0
  %150 = vmatpush1.bf16.msra.mxu0 0
  %151 = vmatprep.subr.bf16.mxu0 0
  %152 = vmatpush1.bf16.msra.mxu0 0
  %153 = vmatprep.subr.bf16.mxu0 0
  %154 = vmatpush1.bf16.msra.mxu0 0
  %155 = vmatprep.subr.bf16.mxu0 0
  %156 = vmatpush1.bf16.msra.mxu0 0
  %157 = vmatprep.subr.bf16.mxu0 0
  %158 = vmatpush1.bf16.msra.mxu0 0
  %159 = vmatprep.subr.bf16.mxu0 0
  %160 = vmatpush1.bf16.msra.mxu0 0
  %161 = vmatprep.subr.bf16.mxu0 0
  %162 = vmatpush1.bf16.msra.mxu0 0
  %163 = vmatprep.subr.bf16.mxu0 0
  %164 = vmatpush1.bf16.msra.mxu0 0
  %165 = vmatprep.subr.bf16.mxu0 0
  %166 = vmatpush1.bf16.msra.mxu0 0
  %167 = vmatprep.mubr.bf16.mxu0 0
  %168 = vmatmul.mubr.bf16.gmra.mrb[0].mxu0 %v133
  %v169 = vpop.f32.mrb[0].mxu0
  %v170 = vadd.f32 %v118, %v169
  %v171 = vpop.f32.mrb[0].mxu0
  %v172 = vpop.f32.mrb[0].mxu0
  %v173 = vadd.f32 %v118, %v172
  %v174 = vpop.f32.mrb[0].mxu0
  %175 = vdwg.mxu0
  %176 = vst.msk [vmem:[%s9] sm:$0xff] %vm62, %v170
  %177 = vst.msk [vmem:[%s9 + $0x8] sm:$0xff] %vm62, %v173
  %v178 = vld [vmem:[%s6] sm:$0xf]
  %v179 = vld [vmem:[%s6 + $0x4] sm:$0xf]
  %v180 = vld [vmem:[%s6 + $0x8] sm:$0xf]
  %v181 = vld [vmem:[%s6 + $0xc] sm:$0xf]
  %v182 = vld [vmem:[%s7] sm:$0x1]
  %v184 = vlaneseq
  %v185 = vshrl.u32 %v184, 7
  %v186 = vsub.s32 0, %v185
  %v187 = vrot.slane %v182, %v186
  %v193 = vunpack.c.l.b16 %v178
  %v194 = vunpack.c.l.b16 %v179
  %v195 = vunpack.c.l.b16 %v180
  %v196 = vunpack.c.l.b16 %v181
  %v197 = vpack.c.b16 %v194, %v193
  %v198 = vpack.c.b16 %v196, %v195
  %201 = vmatprep.subr.bf16.mxu0 0
  %202 = vmatpush1.bf16.msra.mxu0 %v197
  %203 = vmatprep.subr.bf16.mxu0 0
  %204 = vmatpush1.bf16.msra.mxu0 %v198
  %205 = vmatprep.subr.bf16.mxu0 0
  %206 = vmatpush1.bf16.msra.mxu0 0
  %207 = vmatprep.subr.bf16.mxu0 0
  %208 = vmatpush1.bf16.msra.mxu0 0
  %209 = vmatprep.subr.bf16.mxu0 0
  %210 = vmatpush1.bf16.msra.mxu0 0
  %211 = vmatprep.subr.bf16.mxu0 0
  %212 = vmatpush1.bf16.msra.mxu0 0
  %213 = vmatprep.subr.bf16.mxu0 0
  %214 = vmatpush1.bf16.msra.mxu0 0
  %215 = vmatprep.subr.bf16.mxu0 0
  %216 = vmatpush1.bf16.msra.mxu0 0
  %217 = vmatprep.subr.bf16.mxu0 0
  %218 = vmatpush1.bf16.msra.mxu0 0
  %219 = vmatprep.subr.bf16.mxu0 0
  %220 = vmatpush1.bf16.msra.mxu0 0
  %221 = vmatprep.subr.bf16.mxu0 0
  %222 = vmatpush1.bf16.msra.mxu0 0
  %223 = vmatprep.subr.bf16.mxu0 0
  %224 = vmatpush1.bf16.msra.mxu0 0
  %225 = vmatprep.subr.bf16.mxu0 0
  %226 = vmatpush1.bf16.msra.mxu0 0
  %227 = vmatprep.subr.bf16.mxu0 0
  %228 = vmatpush1.bf16.msra.mxu0 0
  %229 = vmatprep.subr.bf16.mxu0 0
  %230 = vmatpush1.bf16.msra.mxu0 0
  %231 = vmatprep.subr.bf16.mxu0 0
  %232 = vmatpush1.bf16.msra.mxu0 0
  %233 = vmatprep.mubr.bf16.mxu0 0
  %234 = vmatmul.mubr.bf16.gmra.mrb[0].mxu0 %v133
  %v235 = vpop.f32.mrb[0].mxu0
  %v236 = vadd.f32 %v187, %v235
  %v237 = vpop.f32.mrb[0].mxu0
  %v238 = vpop.f32.mrb[0].mxu0
  %v239 = vadd.f32 %v187, %v238
  %v240 = vpop.f32.mrb[0].mxu0
  %241 = vdwg.mxu0
  %242 = vst.msk [vmem:[%s10] sm:$0xff] %vm62, %v236
  %243 = vst.msk [vmem:[%s10 + $0x8] sm:$0xff] %vm62, %v239
  // Predicated region
  $region34: #{attention_layer_forward.3} parent=0 // pred_check
    _
  $region35: #{attention_layer_forward.3} parent=0 // pred_check_branch
    %245 = sbr.rel (0) target = $region37
  $region36: #{attention_layer_forward.3} parent=0 // pred_region
    _
  $region37: #{attention_layer_forward.3} parent=0 // pred_fallthru
    _
  // Predicated region
  $region38: #{attention_layer_forward.3} parent=0 // pred_check
    _
  $region39: #{attention_layer_forward.3} parent=0 // pred_check_branch
    %247 = sbr.rel (0) target = $region41
  $region40: #{attention_layer_forward.3} parent=0 // pred_region
    _
  $region41: #{attention_layer_forward.3} parent=0 // pred_fallthru
    _
  // Predicated region
  $region42: #{attention_layer_forward.3} parent=0 // pred_check
    _
  $region43: #{attention_layer_forward.3} parent=0 // pred_check_branch
    %249 = sbr.rel (0) target = $region45
  $region44: #{attention_layer_forward.3} parent=0 // pred_region
    _
  $region45: #{attention_layer_forward.3} parent=0 // pred_fallthru
    _
  // Predicated region
  $region46: #{attention_layer_forward.3} parent=0 // pred_check
    _
  $region47: #{attention_layer_forward.3} parent=0 // pred_check_branch
    %251 = sbr.rel (0) target = $region49
  $region48: #{attention_layer_forward.3} parent=0 // pred_region
    _
  $region49: #{attention_layer_forward.3} parent=0 // pred_fallthru
    _
  // Predicated region
  $region50: #{attention_layer_forward.3} parent=0 // pred_check
    _
  $region51: #{attention_layer_forward.3} parent=0 // pred_check_branch
    %253 = sbr.rel (0) target = $region53
  $region52: #{attention_layer_forward.3} parent=0 // pred_region
    _
  $region53: #{attention_layer_forward.3} parent=0 // pred_fallthru
    _
  // Predicated region
  $region54: #{attention_layer_forward.3} parent=0 // pred_check
    _
  $region55: #{attention_layer_forward.3} parent=0 // pred_check_branch
    %255 = sbr.rel (0) target = $region57
  $region56: #{attention_layer_forward.3} parent=0 // pred_region
    _
  $region57: #{attention_layer_forward.3} parent=0 // pred_fallthru
    _

// kernel: attention_layer_forward.4
$region0: #{attention_layer_forward.4}
  #allocation0 [shape = 'u32[]', space=smem, size = 0x4, offset = 0x4, fixed_abs, tag = 'smem constant byte address 0x4 - core index']
  #allocation1 [shape = 'u32[144,128]{1,0:T(1,128)}', space=vmem, size = 0x12000, scoped, tag = 'internal scratch']
  %s0 = inlined_call_operand.vmem [shape: f32[2,8,32], index: 0, kind: input, shape index: {}]
  %s1 = inlined_call_operand.vmem [shape: f32[2,8,32], index: 1, kind: input, shape index: {}]
  %s2 = inlined_call_operand.vmem [shape: f32[2,8,32], index: 2, kind: input, shape index: {}]
  %s3 = inlined_call_operand.vmem [shape: f32[2,8,32], index: 3, kind: input, shape index: {}]
  %s4 = inlined_call_operand.vmem [shape: bf16[32,32], index: 4, kind: input, shape index: {}]
  %s5 = inlined_call_operand.vmem [shape: f32[1,32], index: 5, kind: input, shape index: {}]
  %s6 = inlined_call_operand.vmem [shape: f32[1,32], index: 6, kind: input, shape index: {}]
  %s7 = inlined_call_operand.vmem [shape: f32[1,32], index: 7, kind: input, shape index: {}]
  %s8 = inlined_call_operand.vmem [shape: f32[2,8,32], index: 8, kind: output, shape index: {}]
  %s9 = sld [smem:[#allocation0]]
  $region65: #{attention_layer_forward.4} parent=0
    _
  %s11 = ssub.s32 1, %s9
  %s12 = scalar_select 0, %s11, %s9
  loop: start=0, step=1, limit=4
  $region2: #{attention_layer_forward.4} parent=0 // loop_pre_header
    _
  $region3: #{attention_layer_forward.4} parent=0 // loop_header
    %s14 = sphi 0, %s18
    %p15 = scmp.ge.s32.totalorder %s14, 4
    %s24 = sphi 0, %s26
    %s27 = sphi 0, %s24
    %s28 = sphi 0, %s27
    %s44 = sphi 0, %s28
    %s50 = sphi 0, %s52
    %s53 = sphi 0, %s50
    %s54 = sphi 0, %s53
    %s70 = sphi 0, %s54
    %s76 = sphi 0, %s78
    %s79 = sphi 0, %s76
    %s80 = sphi 0, %s79
    %s96 = sphi 0, %s80
    %s102 = sphi 0, %s104
    %s105 = sphi 0, %s102
    %s106 = sphi 0, %s105
    %s122 = sphi 0, %s106
    %s126 = sphi 0, %s126
    %s128 = sphi 0, %s126
    %s129 = sphi 0, %s128
    %s143 = sphi 0, %s129
    %s147 = sphi 0, %s147
    %s149 = sphi 0, %s147
    %s150 = sphi 0, %s149
    %s164 = sphi 0, %s150
    %s168 = sphi 0, %s168
    %s170 = sphi 0, %s168
    %s171 = sphi 0, %s170
    %s185 = sphi 0, %s171
    %s189 = sphi 0, %s189
    %s191 = sphi 0, %s189
    %s192 = sphi 0, %s191
    %s206 = sphi 0, %s192
    %s212 = sphi 0, %s214
    %s215 = sphi 0, %s212
    %s216 = sphi 0, %s215
    %s232 = sphi 0, %s216
  $region4: #{attention_layer_forward.4} parent=0 // loop_header_branch
    %17 = sbr.rel (%p15) target = $region8
  $region5: #{attention_layer_forward.4} parent=0 // loop_body
    %s19 = ssub.s32 %s14, 1
    %s20 = ssub.s32 %s14, 2
    %s21 = sadd.s32 %s14, 1
    %s22 = ssub.s32 %s14, %s21
    %p23 = scmp.eq.s32.totalorder %s22, 0
    %s25 = sadd.s32 %s24, 1
    %s26 = scalar_select %p23, %s24, %s25
    %p29 = pneg %p23
    %p30 = scmp.eq.s32.totalorder %s14, 1
    %p31 = por %p29, %p30
    %p32 = scmp.ne.s32.totalorder %s24, %s27
    %p33 = scmp.eq.s32.totalorder %s14, 0
    %p34 = por %p32, %p33
    %p35 = scmp.ne.s32.totalorder %s24, %s27
    %p36 = scmp.eq.s32.totalorder %s19, 1
    %p37 = por %p35, %p36
    %p38 = scmp.ne.s32.totalorder %s27, %s28
    %p39 = scmp.eq.s32.totalorder %s19, 0
    %p40 = por %p38, %p39
    %p41 = scmp.ne.s32.totalorder %s27, %s28
    %p42 = scmp.eq.s32.totalorder %s20, 1
    %p43 = por %p41, %p42
    %p45 = scmp.ne.s32.totalorder %s28, %s44
    %p46 = scmp.eq.s32.totalorder %s20, 0
    %p47 = por %p45, %p46
    %s48 = ssub.s32 %s14, %s21
    %p49 = scmp.eq.s32.totalorder %s48, 0
    %s51 = sadd.s32 %s50, 1
    %s52 = scalar_select %p49, %s50, %s51
    %p55 = pneg %p49
    %p56 = scmp.eq.s32.totalorder %s14, 1
    %p57 = por %p55, %p56
    %p58 = scmp.ne.s32.totalorder %s50, %s53
    %p59 = scmp.eq.s32.totalorder %s14, 0
    %p60 = por %p58, %p59
    %p61 = scmp.ne.s32.totalorder %s50, %s53
    %p62 = scmp.eq.s32.totalorder %s19, 1
    %p63 = por %p61, %p62
    %p64 = scmp.ne.s32.totalorder %s53, %s54
    %p65 = scmp.eq.s32.totalorder %s19, 0
    %p66 = por %p64, %p65
    %p67 = scmp.ne.s32.totalorder %s53, %s54
    %p68 = scmp.eq.s32.totalorder %s20, 1
    %p69 = por %p67, %p68
    %p71 = scmp.ne.s32.totalorder %s54, %s70
    %p72 = scmp.eq.s32.totalorder %s20, 0
    %p73 = por %p71, %p72
    %s74 = ssub.s32 %s14, %s21
    %p75 = scmp.eq.s32.totalorder %s74, 0
    %s77 = sadd.s32 %s76, 1
    %s78 = scalar_select %p75, %s76, %s77
    %p81 = pneg %p75
    %p82 = scmp.eq.s32.totalorder %s14, 1
    %p83 = por %p81, %p82
    %p84 = scmp.ne.s32.totalorder %s76, %s79
    %p85 = scmp.eq.s32.totalorder %s14, 0
    %p86 = por %p84, %p85
    %p87 = scmp.ne.s32.totalorder %s76, %s79
    %p88 = scmp.eq.s32.totalorder %s19, 1
    %p89 = por %p87, %p88
    %p90 = scmp.ne.s32.totalorder %s79, %s80
    %p91 = scmp.eq.s32.totalorder %s19, 0
    %p92 = por %p90, %p91
    %p93 = scmp.ne.s32.totalorder %s79, %s80
    %p94 = scmp.eq.s32.totalorder %s20, 1
    %p95 = por %p93, %p94
    %p97 = scmp.ne.s32.totalorder %s80, %s96
    %p98 = scmp.eq.s32.totalorder %s20, 0
    %p99 = por %p97, %p98
    %s100 = ssub.s32 %s14, %s21
    %p101 = scmp.eq.s32.totalorder %s100, 0
    %s103 = sadd.s32 %s102, 1
    %s104 = scalar_select %p101, %s102, %s103
    %p107 = pneg %p101
    %p108 = scmp.eq.s32.totalorder %s14, 1
    %p109 = por %p107, %p108
    %p110 = scmp.ne.s32.totalorder %s102, %s105
    %p111 = scmp.eq.s32.totalorder %s14, 0
    %p112 = por %p110, %p111
    %p113 = scmp.ne.s32.totalorder %s102, %s105
    %p114 = scmp.eq.s32.totalorder %s19, 1
    %p115 = por %p113, %p114
    %p116 = scmp.ne.s32.totalorder %s105, %s106
    %p117 = scmp.eq.s32.totalorder %s19, 0
    %p118 = por %p116, %p117
    %p119 = scmp.ne.s32.totalorder %s105, %s106
    %p120 = scmp.eq.s32.totalorder %s20, 1
    %p121 = por %p119, %p120
    %p123 = scmp.ne.s32.totalorder %s106, %s122
    %p124 = scmp.eq.s32.totalorder %s20, 0
    %p125 = por %p123, %p124
    %s127 = sadd.s32 %s126, 1
    %p130 = scmp.eq.s32.totalorder %s14, 1
    %p131 = scmp.ne.s32.totalorder %s126, %s128
    %p132 = scmp.eq.s32.totalorder %s14, 0
    %p133 = por %p131, %p132
    %p134 = scmp.ne.s32.totalorder %s126, %s128
    %p135 = scmp.eq.s32.totalorder %s19, 1
    %p136 = por %p134, %p135
    %p137 = scmp.ne.s32.totalorder %s128, %s129
    %p138 = scmp.eq.s32.totalorder %s19, 0
    %p139 = por %p137, %p138
    %p140 = scmp.ne.s32.totalorder %s128, %s129
    %p141 = scmp.eq.s32.totalorder %s20, 1
    %p142 = por %p140, %p141
    %p144 = scmp.ne.s32.totalorder %s129, %s143
    %p145 = scmp.eq.s32.totalorder %s20, 0
    %p146 = por %p144, %p145
    %s148 = sadd.s32 %s147, 1
    %p151 = scmp.eq.s32.totalorder %s14, 1
    %p152 = scmp.ne.s32.totalorder %s147, %s149
    %p153 = scmp.eq.s32.totalorder %s14, 0
    %p154 = por %p152, %p153
    %p155 = scmp.ne.s32.totalorder %s147, %s149
    %p156 = scmp.eq.s32.totalorder %s19, 1
    %p157 = por %p155, %p156
    %p158 = scmp.ne.s32.totalorder %s149, %s150
    %p159 = scmp.eq.s32.totalorder %s19, 0
    %p160 = por %p158, %p159
    %p161 = scmp.ne.s32.totalorder %s149, %s150
    %p162 = scmp.eq.s32.totalorder %s20, 1
    %p163 = por %p161, %p162
    %p165 = scmp.ne.s32.totalorder %s150, %s164
    %p166 = scmp.eq.s32.totalorder %s20, 0
    %p167 = por %p165, %p166
    %s169 = sadd.s32 %s168, 1
    %p172 = scmp.eq.s32.totalorder %s14, 1
    %p173 = scmp.ne.s32.totalorder %s168, %s170
    %p174 = scmp.eq.s32.totalorder %s14, 0
    %p175 = por %p173, %p174
    %p176 = scmp.ne.s32.totalorder %s168, %s170
    %p177 = scmp.eq.s32.totalorder %s19, 1
    %p178 = por %p176, %p177
    %p179 = scmp.ne.s32.totalorder %s170, %s171
    %p180 = scmp.eq.s32.totalorder %s19, 0
    %p181 = por %p179, %p180
    %p182 = scmp.ne.s32.totalorder %s170, %s171
    %p183 = scmp.eq.s32.totalorder %s20, 1
    %p184 = por %p182, %p183
    %p186 = scmp.ne.s32.totalorder %s171, %s185
    %p187 = scmp.eq.s32.totalorder %s20, 0
    %p188 = por %p186, %p187
    %s190 = sadd.s32 %s189, 1
    %p193 = scmp.eq.s32.totalorder %s14, 1
    %p194 = scmp.ne.s32.totalorder %s189, %s191
    %p195 = scmp.eq.s32.totalorder %s14, 0
    %p196 = por %p194, %p195
    %p197 = scmp.ne.s32.totalorder %s189, %s191
    %p198 = scmp.eq.s32.totalorder %s19, 1
    %p199 = por %p197, %p198
    %p200 = scmp.ne.s32.totalorder %s191, %s192
    %p201 = scmp.eq.s32.totalorder %s19, 0
    %p202 = por %p200, %p201
    %p203 = scmp.ne.s32.totalorder %s191, %s192
    %p204 = scmp.eq.s32.totalorder %s20, 1
    %p205 = por %p203, %p204
    %p207 = scmp.ne.s32.totalorder %s192, %s206
    %p208 = scmp.eq.s32.totalorder %s20, 0
    %p209 = por %p207, %p208
    %s210 = ssub.s32 %s14, %s21
    %p211 = scmp.eq.s32.totalorder %s210, 0
    %s213 = sadd.s32 %s212, 1
    %s214 = scalar_select %p211, %s212, %s213
    %p217 = pneg %p211
    %p218 = scmp.eq.s32.totalorder %s14, 1
    %p219 = por %p217, %p218
    %p220 = scmp.ne.s32.totalorder %s212, %s215
    %p221 = scmp.eq.s32.totalorder %s14, 0
    %p222 = por %p220, %p221
    %p223 = scmp.ne.s32.totalorder %s212, %s215
    %p224 = scmp.eq.s32.totalorder %s19, 1
    %p225 = por %p223, %p224
    %p226 = scmp.ne.s32.totalorder %s215, %s216
    %p227 = scmp.eq.s32.totalorder %s19, 0
    %p228 = por %p226, %p227
    %p229 = scmp.ne.s32.totalorder %s215, %s216
    %p230 = scmp.eq.s32.totalorder %s20, 1
    %p231 = por %p229, %p230
    %p233 = scmp.ne.s32.totalorder %s216, %s232
    %p234 = scmp.eq.s32.totalorder %s20, 0
    %p235 = por %p233, %p234
    %p236 = scmp.le.s32.totalorder 1, %s14
    %p237 = scmp.lt.s32.totalorder %s14, 3
    %p238 = pnand %p236, %p237
    %p239 = pneg %p238
    // Predicated region
    $region9: #{attention_layer_forward.4} parent=5 // pred_check
      _
    $region10: #{attention_layer_forward.4} parent=5 // pred_check_branch
      %241 = sbr.rel (%p238) target = $region12
    $region11: #{attention_layer_forward.4} parent=5 // pred_region
      %s242 = ssub.s32 %s14, 1
      // Predicated region
      $region13: #{attention_layer_forward.4} parent=11 // pred_check
        %p243 = pneg %p139
      $region14: #{attention_layer_forward.4} parent=11 // pred_check_branch
        %245 = sbr.rel (%p243) target = $region16
      $region15: #{attention_layer_forward.4} parent=11 // pred_region
        _
      $region16: #{attention_layer_forward.4} parent=11 // pred_fallthru
        _
      // Predicated region
      $region17: #{attention_layer_forward.4} parent=11 // pred_check
        %p246 = pneg %p160
      $region18: #{attention_layer_forward.4} parent=11 // pred_check_branch
        %248 = sbr.rel (%p246) target = $region20
      $region19: #{attention_layer_forward.4} parent=11 // pred_region
        _
      $region20: #{attention_layer_forward.4} parent=11 // pred_fallthru
        _
      // Predicated region
      $region21: #{attention_layer_forward.4} parent=11 // pred_check
        %p249 = pneg %p181
      $region22: #{attention_layer_forward.4} parent=11 // pred_check_branch
        %251 = sbr.rel (%p249) target = $region24
      $region23: #{attention_layer_forward.4} parent=11 // pred_region
        _
      $region24: #{attention_layer_forward.4} parent=11 // pred_fallthru
        _
      // Predicated region
      $region25: #{attention_layer_forward.4} parent=11 // pred_check
        %p252 = pneg %p202
      $region26: #{attention_layer_forward.4} parent=11 // pred_check_branch
        %254 = sbr.rel (%p252) target = $region28
      $region27: #{attention_layer_forward.4} parent=11 // pred_region
        _
      $region28: #{attention_layer_forward.4} parent=11 // pred_fallthru
        _
    $region12: #{attention_layer_forward.4} parent=5 // pred_fallthru
      _
    %p255 = scmp.lt.s32.totalorder %s14, 2
    // Predicated region
    $region29: #{attention_layer_forward.4} parent=5 // pred_check
      %p256 = pneg %p255
    $region30: #{attention_layer_forward.4} parent=5 // pred_check_branch
      %258 = sbr.rel (%p256) target = $region32
    $region31: #{attention_layer_forward.4} parent=5 // pred_region
      // Predicated region
      $region33: #{attention_layer_forward.4} parent=31 // pred_check
        %p259 = pneg %p34
      $region34: #{attention_layer_forward.4} parent=31 // pred_check_branch
        %261 = sbr.rel (%p259) target = $region36
      $region35: #{attention_layer_forward.4} parent=31 // pred_region
        %p262 = scmp.lt.s32.totalorder %s14, 1
        %s263 = scalar_select %p262, %s14, 1
        %s264 = smul.addr %s263, 8
        %s265 = scalar_lea.vmem %s0, %s264
      $region36: #{attention_layer_forward.4} parent=31 // pred_fallthru
        _
      // Predicated region
      $region37: #{attention_layer_forward.4} parent=31 // pred_check
        %p266 = pneg %p60
      $region38: #{attention_layer_forward.4} parent=31 // pred_check_branch
        %268 = sbr.rel (%p266) target = $region40
      $region39: #{attention_layer_forward.4} parent=31 // pred_region
        %p269 = scmp.lt.s32.totalorder %s14, 1
        %s270 = scalar_select %p269, %s14, 1
        %s271 = smul.addr %s270, 8
        %s272 = scalar_lea.vmem %s1, %s271
      $region40: #{attention_layer_forward.4} parent=31 // pred_fallthru
        _
      // Predicated region
      $region41: #{attention_layer_forward.4} parent=31 // pred_check
        %p273 = pneg %p86
      $region42: #{attention_layer_forward.4} parent=31 // pred_check_branch
        %275 = sbr.rel (%p273) target = $region44
      $region43: #{attention_layer_forward.4} parent=31 // pred_region
        %p276 = scmp.lt.s32.totalorder %s14, 1
        %s277 = scalar_select %p276, %s14, 1
        %s278 = smul.addr %s277, 8
        %s279 = scalar_lea.vmem %s2, %s278
      $region44: #{attention_layer_forward.4} parent=31 // pred_fallthru
        _
      // Predicated region
      $region45: #{attention_layer_forward.4} parent=31 // pred_check
        %p280 = pneg %p112
      $region46: #{attention_layer_forward.4} parent=31 // pred_check_branch
        %282 = sbr.rel (%p280) target = $region48
      $region47: #{attention_layer_forward.4} parent=31 // pred_region
        %p283 = scmp.lt.s32.totalorder %s14, 1
        %s284 = scalar_select %p283, %s14, 1
        %s285 = smul.addr %s284, 8
        %s286 = scalar_lea.vmem %s3, %s285
      $region48: #{attention_layer_forward.4} parent=31 // pred_fallthru
        _
    $region32: #{attention_layer_forward.4} parent=5 // pred_fallthru
      _
    %p287 = scmp.le.s32.totalorder 1, %s14
    %p288 = scmp.lt.s32.totalorder %s14, 3
    %p289 = pnand %p287, %p288
    %p290 = pneg %p289
    // Predicated region
    $region49: #{attention_layer_forward.4} parent=5 // pred_check
      _
    $region50: #{attention_layer_forward.4} parent=5 // pred_check_branch
      %292 = sbr.rel (%p289) target = $region52
    $region51: #{attention_layer_forward.4} parent=5 // pred_region
      %s293 = ssub.s32 %s14, 1
      %p294 = scmp.lt.s32.totalorder %s19, 1
      %s295 = scalar_select %p294, %s19, 1
      %s296 = smul.addr %s295, 8
      %s297 = scalar_lea.vmem %s0, %s296
      %p298 = pneg %p40
      %p299 = pneg %p37
      %p300 = scmp.lt.s32.totalorder %s19, 1
      %s301 = scalar_select %p300, %s19, 1
      %s302 = smul.addr %s301, 8
      %s303 = scalar_lea.vmem %s1, %s302
      %p304 = pneg %p66
      %p305 = pneg %p63
      %p306 = scmp.lt.s32.totalorder %s19, 1
      %s307 = scalar_select %p306, %s19, 1
      %s308 = smul.addr %s307, 8
      %s309 = scalar_lea.vmem %s2, %s308
      %p310 = pneg %p92
      %p311 = pneg %p89
      %p312 = scmp.lt.s32.totalorder %s19, 1
      %s313 = scalar_select %p312, %s19, 1
      %s314 = smul.addr %s313, 8
      %s315 = scalar_lea.vmem %s3, %s314
      %p316 = pneg %p118
      %p317 = pneg %p115
      %p318 = pneg %p139
      %p319 = pneg %p136
      %p320 = pneg %p160
      %p321 = pneg %p157
      %p322 = pneg %p181
      %p323 = pneg %p178
      %p324 = pneg %p202
      %p325 = pneg %p199
      %p326 = pneg %p228
      %p327 = pneg %p225
      %p328 = scmp.lt.s32.totalorder %s19, 1
      %s329 = scalar_select %p328, %s19, 1
      %s330 = smul.addr %s329, 8
      %s331 = scalar_lea.vmem %s8, %s330
      %p332 = scmp.lt.s32.totalorder %s19, 1
      %s333 = scalar_select %p332, %s19, 1
      %s334 = smul.addr %s333, 8
      %s335 = scalar_lea.vmem %s0, %s334
      %p336 = scmp.lt.s32.totalorder %s19, 1
      %s337 = scalar_select %p336, %s19, 1
      %s338 = smul.addr %s337, 8
      %s339 = scalar_lea.vmem %s1, %s338
      %p340 = scmp.lt.s32.totalorder %s19, 1
      %s341 = scalar_select %p340, %s19, 1
      %s342 = smul.addr %s341, 8
      %s343 = scalar_lea.vmem %s2, %s342
      %p344 = scmp.lt.s32.totalorder %s19, 1
      %s345 = scalar_select %p344, %s19, 1
      %s346 = smul.addr %s345, 8
      %s347 = scalar_lea.vmem %s3, %s346
      %p348 = scmp.lt.s32.totalorder %s19, 1
      %s349 = scalar_select %p348, %s19, 1
      %s350 = smul.addr %s349, 8
      %s351 = scalar_lea.vmem %s8, %s350
      %v353 = vld [vmem:[%s335] sm:$0xff]
      %v354 = vld [vmem:[%s339] sm:$0xff]
      %v355 = vld [vmem:[%s343] sm:$0xff]
      %v356 = vmul.f32 %v353, 0.35355338
      %v357 = vpack.c.bf16 %v356, %v356
      %v358 = vpack.c.bf16 %v354, %v354
      %v359 = vpack.c.bf16 %v355, %v355
      %vm360 = vcmask 64512
      %v362 = vsel %vm360, %v357, 0
      %v365 = vsel %vm360, %v358, 0
      %367 = vmatprep.subr.bf16.mxu0 0
      %368 = vmatpush1.bf16.xpose.msra.mxu0 %v365
      %369 = vmatprep.subr.bf16.mxu0 0
      %370 = vmatpush1.bf16.xpose.msra.mxu0 0
      %371 = vmatprep.subr.bf16.mxu0 0
      %372 = vmatpush1.bf16.xpose.msra.mxu0 0
      %373 = vmatprep.subr.bf16.mxu0 0
      %374 = vmatpush1.bf16.xpose.msra.mxu0 0
      %375 = vmatprep.subr.bf16.mxu0 0
      %376 = vmatpush1.bf16.xpose.msra.mxu0 0
      %377 = vmatprep.subr.bf16.mxu0 0
      %378 = vmatpush1.bf16.xpose.msra.mxu0 0
      %379 = vmatprep.subr.bf16.mxu0 0
      %380 = vmatpush1.bf16.xpose.msra.mxu0 0
      %381 = vmatprep.subr.bf16.mxu0 0
      %382 = vmatpush1.bf16.xpose.msra.mxu0 0
      %383 = vmatprep.subr.bf16.mxu0 0
      %384 = vmatpush1.bf16.xpose.msra.mxu0 0
      %385 = vmatprep.subr.bf16.mxu0 0
      %386 = vmatpush1.bf16.xpose.msra.mxu0 0
      %387 = vmatprep.subr.bf16.mxu0 0
      %388 = vmatpush1.bf16.xpose.msra.mxu0 0
      %389 = vmatprep.subr.bf16.mxu0 0
      %390 = vmatpush1.bf16.xpose.msra.mxu0 0
      %391 = vmatprep.subr.bf16.mxu0 0
      %392 = vmatpush1.bf16.xpose.msra.mxu0 0
      %393 = vmatprep.subr.bf16.mxu0 0
      %394 = vmatpush1.bf16.xpose.msra.mxu0 0
      %395 = vmatprep.subr.bf16.mxu0 0
      %396 = vmatpush1.bf16.xpose.msra.mxu0 0
      %397 = vmatprep.subr.bf16.mxu0 0
      %398 = vmatpush1.bf16.xpose.msra.mxu0 0
      %399 = vmatprep.mubr.bf16.mxu0 0
      %400 = vmatmul.mubr.bf16.gmra.mrb[0].mxu0 %v362
      %v401 = vpop.f32.mrb[0].mxu0
      %v402 = vadd.f32 0.0, %v401
      %v403 = vpop.f32.mrb[0].mxu0
      %v404 = vpop.f32.mrb[0].mxu0
      %v405 = vpop.f32.mrb[0].mxu0
      %406 = vdwg.mxu0
      %v407 = vsel %vm360, %v402, -inf
      %408 = vmax.xlane.f32.xlu0 %v407
      %v409 = vpop.xlane.xlu0 %408
      %v410 = vsub.f32 %v402, %v409
      %v411 = vmul.f32 %v410, 1.442695
      %v412 = vpow.pop %v411
      %v413 = vsel %vm360, %v412, 0.0
      %414 = vadd.xlane.f32.xlu0 %v413
      %v415 = vpop.xlane.xlu0 %414
      %v416 = vpack.c.bf16 %v412, %v412
      %v418 = vsel %vm360, %v416, 0
      %vm420 = vcmask 1043456
      %v422 = vsel %vm420, %v359, 0
      %424 = vmatprep.subr.bf16.mxu0 0
      %425 = vmatpush1.bf16.msra.mxu0 %v422
      %426 = vmatprep.subr.bf16.mxu0 0
      %427 = vmatpush1.bf16.msra.mxu0 0
      %428 = vmatprep.subr.bf16.mxu0 0
      %429 = vmatpush1.bf16.msra.mxu0 0
      %430 = vmatprep.subr.bf16.mxu0 0
      %431 = vmatpush1.bf16.msra.mxu0 0
      %432 = vmatprep.subr.bf16.mxu0 0
      %433 = vmatpush1.bf16.msra.mxu0 0
      %434 = vmatprep.subr.bf16.mxu0 0
      %435 = vmatpush1.bf16.msra.mxu0 0
      %436 = vmatprep.subr.bf16.mxu0 0
      %437 = vmatpush1.bf16.msra.mxu0 0
      %438 = vmatprep.subr.bf16.mxu0 0
      %439 = vmatpush1.bf16.msra.mxu0 0
      %440 = vmatprep.subr.bf16.mxu0 0
      %441 = vmatpush1.bf16.msra.mxu0 0
      %442 = vmatprep.subr.bf16.mxu0 0
      %443 = vmatpush1.bf16.msra.mxu0 0
      %444 = vmatprep.subr.bf16.mxu0 0
      %445 = vmatpush1.bf16.msra.mxu0 0
      %446 = vmatprep.subr.bf16.mxu0 0
      %447 = vmatpush1.bf16.msra.mxu0 0
      %448 = vmatprep.subr.bf16.mxu0 0
      %449 = vmatpush1.bf16.msra.mxu0 0
      %450 = vmatprep.subr.bf16.mxu0 0
      %451 = vmatpush1.bf16.msra.mxu0 0
      %452 = vmatprep.subr.bf16.mxu0 0
      %453 = vmatpush1.bf16.msra.mxu0 0
      %454 = vmatprep.subr.bf16.mxu0 0
      %455 = vmatpush1.bf16.msra.mxu0 0
      %456 = vmatprep.mubr.bf16.mxu0 0
      %457 = vmatmul.mubr.bf16.gmra.mrb[0].mxu0 %v418
      %v458 = vpop.f32.mrb[0].mxu0
      %v459 = vadd.f32 0.0, %v458
      %v460 = vpop.f32.mrb[0].mxu0
      %v461 = vpop.f32.mrb[0].mxu0
      %v462 = vpop.f32.mrb[0].mxu0
      %463 = vdwg.mxu0
      %v464 = vrcp.pop %v415
      %v465 = vmul.f32 %v459, %v464
      %v466 = vpack.c.bf16 %v465, %v465
      %v467 = vld [vmem:[%s4] sm:$0xf]
      %469 = vrot.lane.b32.xlu0 %v357, 120
      %v470 = vpop.permute.xlu0 %469
      %472 = vrot.lane.b32.xlu0 %v358, 120
      %v473 = vpop.permute.xlu0 %472
      %v475 = vsel %vm360, %v470, 0
      %v478 = vsel %vm360, %v473, 0
      %480 = vmatprep.subr.bf16.mxu0 0
      %481 = vmatpush1.bf16.xpose.msra.mxu0 %v478
      %482 = vmatprep.subr.bf16.mxu0 0
      %483 = vmatpush1.bf16.xpose.msra.mxu0 0
      %484 = vmatprep.subr.bf16.mxu0 0
      %485 = vmatpush1.bf16.xpose.msra.mxu0 0
      %486 = vmatprep.subr.bf16.mxu0 0
      %487 = vmatpush1.bf16.xpose.msra.mxu0 0
      %488 = vmatprep.subr.bf16.mxu0 0
      %489 = vmatpush1.bf16.xpose.msra.mxu0 0
      %490 = vmatprep.subr.bf16.mxu0 0
      %491 = vmatpush1.bf16.xpose.msra.mxu0 0
      %492 = vmatprep.subr.bf16.mxu0 0
      %493 = vmatpush1.bf16.xpose.msra.mxu0 0
      %494 = vmatprep.subr.bf16.mxu0 0
      %495 = vmatpush1.bf16.xpose.msra.mxu0 0
      %496 = vmatprep.subr.bf16.mxu0 0
      %497 = vmatpush1.bf16.xpose.msra.mxu0 0
      %498 = vmatprep.subr.bf16.mxu0 0
      %499 = vmatpush1.bf16.xpose.msra.mxu0 0
      %500 = vmatprep.subr.bf16.mxu0 0
      %501 = vmatpush1.bf16.xpose.msra.mxu0 0
      %502 = vmatprep.subr.bf16.mxu0 0
      %503 = vmatpush1.bf16.xpose.msra.mxu0 0
      %504 = vmatprep.subr.bf16.mxu0 0
      %505 = vmatpush1.bf16.xpose.msra.mxu0 0
      %506 = vmatprep.subr.bf16.mxu0 0
      %507 = vmatpush1.bf16.xpose.msra.mxu0 0
      %508 = vmatprep.subr.bf16.mxu0 0
      %509 = vmatpush1.bf16.xpose.msra.mxu0 0
      %510 = vmatprep.subr.bf16.mxu0 0
      %511 = vmatpush1.bf16.xpose.msra.mxu0 0
      %512 = vmatprep.mubr.bf16.mxu0 0
      %513 = vmatmul.mubr.bf16.gmra.mrb[0].mxu0 %v475
      %v514 = vpop.f32.mrb[0].mxu0
      %v515 = vadd.f32 0.0, %v514
      %v516 = vpop.f32.mrb[0].mxu0
      %v517 = vpop.f32.mrb[0].mxu0
      %v518 = vpop.f32.mrb[0].mxu0
      %519 = vdwg.mxu0
      %v520 = vsel %vm360, %v515, -inf
      %521 = vmax.xlane.f32.xlu0 %v520
      %v522 = vpop.xlane.xlu0 %521
      %v523 = vsub.f32 %v515, %v522
      %v524 = vmul.f32 %v523, 1.442695
      %v525 = vpow.pop %v524
      %v526 = vsel %vm360, %v525, 0.0
      %527 = vadd.xlane.f32.xlu0 %v526
      %v528 = vpop.xlane.xlu0 %527
      %v529 = vpack.c.bf16 %v525, %v525
      %531 = vrot.lane.b32.xlu0 %v359, 120
      %v532 = vpop.permute.xlu0 %531
      %v534 = vsel %vm360, %v529, 0
      %v537 = vsel %vm420, %v532, 0
      %539 = vmatprep.subr.bf16.mxu0 0
      %540 = vmatpush1.bf16.msra.mxu0 %v537
      %541 = vmatprep.subr.bf16.mxu0 0
      %542 = vmatpush1.bf16.msra.mxu0 0
      %543 = vmatprep.subr.bf16.mxu0 0
      %544 = vmatpush1.bf16.msra.mxu0 0
      %545 = vmatprep.subr.bf16.mxu0 0
      %546 = vmatpush1.bf16.msra.mxu0 0
      %547 = vmatprep.subr.bf16.mxu0 0
      %548 = vmatpush1.bf16.msra.mxu0 0
      %549 = vmatprep.subr.bf16.mxu0 0
      %550 = vmatpush1.bf16.msra.mxu0 0
      %551 = vmatprep.subr.bf16.mxu0 0
      %552 = vmatpush1.bf16.msra.mxu0 0
      %553 = vmatprep.subr.bf16.mxu0 0
      %554 = vmatpush1.bf16.msra.mxu0 0
      %555 = vmatprep.subr.bf16.mxu0 0
      %556 = vmatpush1.bf16.msra.mxu0 0
      %557 = vmatprep.subr.bf16.mxu0 0
      %558 = vmatpush1.bf16.msra.mxu0 0
      %559 = vmatprep.subr.bf16.mxu0 0
      %560 = vmatpush1.bf16.msra.mxu0 0
      %561 = vmatprep.subr.bf16.mxu0 0
      %562 = vmatpush1.bf16.msra.mxu0 0
      %563 = vmatprep.subr.bf16.mxu0 0
      %564 = vmatpush1.bf16.msra.mxu0 0
      %565 = vmatprep.subr.bf16.mxu0 0
      %566 = vmatpush1.bf16.msra.mxu0 0
      %567 = vmatprep.subr.bf16.mxu0 0
      %568 = vmatpush1.bf16.msra.mxu0 0
      %569 = vmatprep.subr.bf16.mxu0 0
      %570 = vmatpush1.bf16.msra.mxu0 0
      %571 = vmatprep.mubr.bf16.mxu0 0
      %572 = vmatmul.mubr.bf16.gmra.mrb[0].mxu0 %v534
      %v573 = vpop.f32.mrb[0].mxu0
      %v574 = vadd.f32 0.0, %v573
      %v575 = vpop.f32.mrb[0].mxu0
      %v576 = vpop.f32.mrb[0].mxu0
      %v577 = vpop.f32.mrb[0].mxu0
      %578 = vdwg.mxu0
      %v579 = vrcp.pop %v528
      %v580 = vmul.f32 %v574, %v579
      %v581 = vpack.c.bf16 %v580, %v580
      %v582 = vld [vmem:[%s4 + $0x4] sm:$0xf]
      %v584 = vsel %vm360, %v581, 0
      %v587 = vsel %vm420, %v582, 0
      %589 = vmatprep.subr.bf16.mxu0 0
      %590 = vmatpush1.bf16.msra.mxu0 %v587
      %591 = vmatprep.subr.bf16.mxu0 0
      %592 = vmatpush1.bf16.msra.mxu0 0
      %593 = vmatprep.subr.bf16.mxu0 0
      %594 = vmatpush1.bf16.msra.mxu0 0
      %595 = vmatprep.subr.bf16.mxu0 0
      %596 = vmatpush1.bf16.msra.mxu0 0
      %597 = vmatprep.subr.bf16.mxu0 0
      %598 = vmatpush1.bf16.msra.mxu0 0
      %599 = vmatprep.subr.bf16.mxu0 0
      %600 = vmatpush1.bf16.msra.mxu0 0
      %601 = vmatprep.subr.bf16.mxu0 0
      %602 = vmatpush1.bf16.msra.mxu0 0
      %603 = vmatprep.subr.bf16.mxu0 0
      %604 = vmatpush1.bf16.msra.mxu0 0
      %605 = vmatprep.subr.bf16.mxu0 0
      %606 = vmatpush1.bf16.msra.mxu0 0
      %607 = vmatprep.subr.bf16.mxu0 0
      %608 = vmatpush1.bf16.msra.mxu0 0
      %609 = vmatprep.subr.bf16.mxu0 0
      %610 = vmatpush1.bf16.msra.mxu0 0
      %611 = vmatprep.subr.bf16.mxu0 0
      %612 = vmatpush1.bf16.msra.mxu0 0
      %613 = vmatprep.subr.bf16.mxu0 0
      %614 = vmatpush1.bf16.msra.mxu0 0
      %615 = vmatprep.subr.bf16.mxu0 0
      %616 = vmatpush1.bf16.msra.mxu0 0
      %617 = vmatprep.subr.bf16.mxu0 0
      %618 = vmatpush1.bf16.msra.mxu0 0
      %619 = vmatprep.subr.bf16.mxu0 0
      %620 = vmatpush1.bf16.msra.mxu0 0
      %621 = vmatprep.mubr.bf16.mxu0 0
      %622 = vmatmul.mubr.bf16.gmra.mrb[0].mxu0 %v584
      %v623 = vpop.f32.mrb[0].mxu0
      %v624 = vadd.f32 0.0, %v623
      %v625 = vpop.f32.mrb[0].mxu0
      %v626 = vpop.f32.mrb[0].mxu0
      %v627 = vpop.f32.mrb[0].mxu0
      %628 = vdwg.mxu0
      %v630 = vsel %vm360, %v466, 0
      %v633 = vsel %vm420, %v467, 0
      %635 = vmatprep.subr.bf16.mxu0 0
      %636 = vmatpush1.bf16.msra.mxu0 %v633
      %637 = vmatprep.subr.bf16.mxu0 0
      %638 = vmatpush1.bf16.msra.mxu0 0
      %639 = vmatprep.subr.bf16.mxu0 0
      %640 = vmatpush1.bf16.msra.mxu0 0
      %641 = vmatprep.subr.bf16.mxu0 0
      %642 = vmatpush1.bf16.msra.mxu0 0
      %643 = vmatprep.subr.bf16.mxu0 0
      %644 = vmatpush1.bf16.msra.mxu0 0
      %645 = vmatprep.subr.bf16.mxu0 0
      %646 = vmatpush1.bf16.msra.mxu0 0
      %647 = vmatprep.subr.bf16.mxu0 0
      %648 = vmatpush1.bf16.msra.mxu0 0
      %649 = vmatprep.subr.bf16.mxu0 0
      %650 = vmatpush1.bf16.msra.mxu0 0
      %651 = vmatprep.subr.bf16.mxu0 0
      %652 = vmatpush1.bf16.msra.mxu0 0
      %653 = vmatprep.subr.bf16.mxu0 0
      %654 = vmatpush1.bf16.msra.mxu0 0
      %655 = vmatprep.subr.bf16.mxu0 0
      %656 = vmatpush1.bf16.msra.mxu0 0
      %657 = vmatprep.subr.bf16.mxu0 0
      %658 = vmatpush1.bf16.msra.mxu0 0
      %659 = vmatprep.subr.bf16.mxu0 0
      %660 = vmatpush1.bf16.msra.mxu0 0
      %661 = vmatprep.subr.bf16.mxu0 0
      %662 = vmatpush1.bf16.msra.mxu0 0
      %663 = vmatprep.subr.bf16.mxu0 0
      %664 = vmatpush1.bf16.msra.mxu0 0
      %665 = vmatprep.subr.bf16.mxu0 0
      %666 = vmatpush1.bf16.msra.mxu0 0
      %667 = vmatprep.mubr.bf16.mxu0 0
      %668 = vmatmul.mubr.bf16.gmra.mrb[0].mxu0 %v630
      %v669 = vpop.f32.mrb[0].mxu0
      %v670 = vadd.f32 %v624, %v669
      %v671 = vpop.f32.mrb[0].mxu0
      %v672 = vpop.f32.mrb[0].mxu0
      %v673 = vpop.f32.mrb[0].mxu0
      %674 = vdwg.mxu0
      %675 = vrot.lane.b32.xlu0 %v357, 112
      %v676 = vpop.permute.xlu0 %675
      %677 = vrot.lane.b32.xlu0 %v358, 112
      %v678 = vpop.permute.xlu0 %677
      %v680 = vsel %vm360, %v676, 0
      %v683 = vsel %vm360, %v678, 0
      %685 = vmatprep.subr.bf16.mxu0 0
      %686 = vmatpush1.bf16.xpose.msra.mxu0 %v683
      %687 = vmatprep.subr.bf16.mxu0 0
      %688 = vmatpush1.bf16.xpose.msra.mxu0 0
      %689 = vmatprep.subr.bf16.mxu0 0
      %690 = vmatpush1.bf16.xpose.msra.mxu0 0
      %691 = vmatprep.subr.bf16.mxu0 0
      %692 = vmatpush1.bf16.xpose.msra.mxu0 0
      %693 = vmatprep.subr.bf16.mxu0 0
      %694 = vmatpush1.bf16.xpose.msra.mxu0 0
      %695 = vmatprep.subr.bf16.mxu0 0
      %696 = vmatpush1.bf16.xpose.msra.mxu0 0
      %697 = vmatprep.subr.bf16.mxu0 0
      %698 = vmatpush1.bf16.xpose.msra.mxu0 0
      %699 = vmatprep.subr.bf16.mxu0 0
      %700 = vmatpush1.bf16.xpose.msra.mxu0 0
      %701 = vmatprep.subr.bf16.mxu0 0
      %702 = vmatpush1.bf16.xpose.msra.mxu0 0
      %703 = vmatprep.subr.bf16.mxu0 0
      %704 = vmatpush1.bf16.xpose.msra.mxu0 0
      %705 = vmatprep.subr.bf16.mxu0 0
      %706 = vmatpush1.bf16.xpose.msra.mxu0 0
      %707 = vmatprep.subr.bf16.mxu0 0
      %708 = vmatpush1.bf16.xpose.msra.mxu0 0
      %709 = vmatprep.subr.bf16.mxu0 0
      %710 = vmatpush1.bf16.xpose.msra.mxu0 0
      %711 = vmatprep.subr.bf16.mxu0 0
      %712 = vmatpush1.bf16.xpose.msra.mxu0 0
      %713 = vmatprep.subr.bf16.mxu0 0
      %714 = vmatpush1.bf16.xpose.msra.mxu0 0
      %715 = vmatprep.subr.bf16.mxu0 0
      %716 = vmatpush1.bf16.xpose.msra.mxu0 0
      %717 = vmatprep.mubr.bf16.mxu0 0
      %718 = vmatmul.mubr.bf16.gmra.mrb[0].mxu0 %v680
      %v719 = vpop.f32.mrb[0].mxu0
      %v720 = vadd.f32 0.0, %v719
      %v721 = vpop.f32.mrb[0].mxu0
      %v722 = vpop.f32.mrb[0].mxu0
      %v723 = vpop.f32.mrb[0].mxu0
      %724 = vdwg.mxu0
      %v725 = vsel %vm360, %v720, -inf
      %726 = vmax.xlane.f32.xlu0 %v725
      %v727 = vpop.xlane.xlu0 %726
      %v728 = vsub.f32 %v720, %v727
      %v729 = vmul.f32 %v728, 1.442695
      %v730 = vpow.pop %v729
      %v731 = vsel %vm360, %v730, 0.0
      %732 = vadd.xlane.f32.xlu0 %v731
      %v733 = vpop.xlane.xlu0 %732
      %v734 = vpack.c.bf16 %v730, %v730
      %735 = vrot.lane.b32.xlu0 %v359, 112
      %v736 = vpop.permute.xlu0 %735
      %v738 = vsel %vm360, %v734, 0
      %v741 = vsel %vm420, %v736, 0
      %743 = vmatprep.subr.bf16.mxu0 0
      %744 = vmatpush1.bf16.msra.mxu0 %v741
      %745 = vmatprep.subr.bf16.mxu0 0
      %746 = vmatpush1.bf16.msra.mxu0 0
      %747 = vmatprep.subr.bf16.mxu0 0
      %748 = vmatpush1.bf16.msra.mxu0 0
      %749 = vmatprep.subr.bf16.mxu0 0
      %750 = vmatpush1.bf16.msra.mxu0 0
      %751 = vmatprep.subr.bf16.mxu0 0
      %752 = vmatpush1.bf16.msra.mxu0 0
      %753 = vmatprep.subr.bf16.mxu0 0
      %754 = vmatpush1.bf16.msra.mxu0 0
      %755 = vmatprep.subr.bf16.mxu0 0
      %756 = vmatpush1.bf16.msra.mxu0 0
      %757 = vmatprep.subr.bf16.mxu0 0
      %758 = vmatpush1.bf16.msra.mxu0 0
      %759 = vmatprep.subr.bf16.mxu0 0
      %760 = vmatpush1.bf16.msra.mxu0 0
      %761 = vmatprep.subr.bf16.mxu0 0
      %762 = vmatpush1.bf16.msra.mxu0 0
      %763 = vmatprep.subr.bf16.mxu0 0
      %764 = vmatpush1.bf16.msra.mxu0 0
      %765 = vmatprep.subr.bf16.mxu0 0
      %766 = vmatpush1.bf16.msra.mxu0 0
      %767 = vmatprep.subr.bf16.mxu0 0
      %768 = vmatpush1.bf16.msra.mxu0 0
      %769 = vmatprep.subr.bf16.mxu0 0
      %770 = vmatpush1.bf16.msra.mxu0 0
      %771 = vmatprep.subr.bf16.mxu0 0
      %772 = vmatpush1.bf16.msra.mxu0 0
      %773 = vmatprep.subr.bf16.mxu0 0
      %774 = vmatpush1.bf16.msra.mxu0 0
      %775 = vmatprep.mubr.bf16.mxu0 0
      %776 = vmatmul.mubr.bf16.gmra.mrb[0].mxu0 %v738
      %v777 = vpop.f32.mrb[0].mxu0
      %v778 = vadd.f32 0.0, %v777
      %v779 = vpop.f32.mrb[0].mxu0
      %v780 = vpop.f32.mrb[0].mxu0
      %v781 = vpop.f32.mrb[0].mxu0
      %782 = vdwg.mxu0
      %v783 = vrcp.pop %v733
      %v784 = vmul.f32 %v778, %v783
      %v785 = vpack.c.bf16 %v784, %v784
      %v786 = vld [vmem:[%s4 + $0x8] sm:$0xf]
      %v788 = vsel %vm360, %v785, 0
      %v791 = vsel %vm420, %v786, 0
      %793 = vmatprep.subr.bf16.mxu0 0
      %794 = vmatpush1.bf16.msra.mxu0 %v791
      %795 = vmatprep.subr.bf16.mxu0 0
      %796 = vmatpush1.bf16.msra.mxu0 0
      %797 = vmatprep.subr.bf16.mxu0 0
      %798 = vmatpush1.bf16.msra.mxu0 0
      %799 = vmatprep.subr.bf16.mxu0 0
      %800 = vmatpush1.bf16.msra.mxu0 0
      %801 = vmatprep.subr.bf16.mxu0 0
      %802 = vmatpush1.bf16.msra.mxu0 0
      %803 = vmatprep.subr.bf16.mxu0 0
      %804 = vmatpush1.bf16.msra.mxu0 0
      %805 = vmatprep.subr.bf16.mxu0 0
      %806 = vmatpush1.bf16.msra.mxu0 0
      %807 = vmatprep.subr.bf16.mxu0 0
      %808 = vmatpush1.bf16.msra.mxu0 0
      %809 = vmatprep.subr.bf16.mxu0 0
      %810 = vmatpush1.bf16.msra.mxu0 0
      %811 = vmatprep.subr.bf16.mxu0 0
      %812 = vmatpush1.bf16.msra.mxu0 0
      %813 = vmatprep.subr.bf16.mxu0 0
      %814 = vmatpush1.bf16.msra.mxu0 0
      %815 = vmatprep.subr.bf16.mxu0 0
      %816 = vmatpush1.bf16.msra.mxu0 0
      %817 = vmatprep.subr.bf16.mxu0 0
      %818 = vmatpush1.bf16.msra.mxu0 0
      %819 = vmatprep.subr.bf16.mxu0 0
      %820 = vmatpush1.bf16.msra.mxu0 0
      %821 = vmatprep.subr.bf16.mxu0 0
      %822 = vmatpush1.bf16.msra.mxu0 0
      %823 = vmatprep.subr.bf16.mxu0 0
      %824 = vmatpush1.bf16.msra.mxu0 0
      %825 = vmatprep.mubr.bf16.mxu0 0
      %826 = vmatmul.mubr.bf16.gmra.mrb[0].mxu0 %v788
      %v827 = vpop.f32.mrb[0].mxu0
      %v828 = vadd.f32 0.0, %v827
      %v829 = vpop.f32.mrb[0].mxu0
      %v830 = vpop.f32.mrb[0].mxu0
      %v831 = vpop.f32.mrb[0].mxu0
      %832 = vdwg.mxu0
      %v833 = vadd.f32 %v670, %v828
      %834 = vrot.lane.b32.xlu0 %v357, 104
      %v835 = vpop.permute.xlu0 %834
      %836 = vrot.lane.b32.xlu0 %v358, 104
      %v837 = vpop.permute.xlu0 %836
      %v839 = vsel %vm360, %v835, 0
      %v842 = vsel %vm360, %v837, 0
      %844 = vmatprep.subr.bf16.mxu0 0
      %845 = vmatpush1.bf16.xpose.msra.mxu0 %v842
      %846 = vmatprep.subr.bf16.mxu0 0
      %847 = vmatpush1.bf16.xpose.msra.mxu0 0
      %848 = vmatprep.subr.bf16.mxu0 0
      %849 = vmatpush1.bf16.xpose.msra.mxu0 0
      %850 = vmatprep.subr.bf16.mxu0 0
      %851 = vmatpush1.bf16.xpose.msra.mxu0 0
      %852 = vmatprep.subr.bf16.mxu0 0
      %853 = vmatpush1.bf16.xpose.msra.mxu0 0
      %854 = vmatprep.subr.bf16.mxu0 0
      %855 = vmatpush1.bf16.xpose.msra.mxu0 0
      %856 = vmatprep.subr.bf16.mxu0 0
      %857 = vmatpush1.bf16.xpose.msra.mxu0 0
      %858 = vmatprep.subr.bf16.mxu0 0
      %859 = vmatpush1.bf16.xpose.msra.mxu0 0
      %860 = vmatprep.subr.bf16.mxu0 0
      %861 = vmatpush1.bf16.xpose.msra.mxu0 0
      %862 = vmatprep.subr.bf16.mxu0 0
      %863 = vmatpush1.bf16.xpose.msra.mxu0 0
      %864 = vmatprep.subr.bf16.mxu0 0
      %865 = vmatpush1.bf16.xpose.msra.mxu0 0
      %866 = vmatprep.subr.bf16.mxu0 0
      %867 = vmatpush1.bf16.xpose.msra.mxu0 0
      %868 = vmatprep.subr.bf16.mxu0 0
      %869 = vmatpush1.bf16.xpose.msra.mxu0 0
      %870 = vmatprep.subr.bf16.mxu0 0
      %871 = vmatpush1.bf16.xpose.msra.mxu0 0
      %872 = vmatprep.subr.bf16.mxu0 0
      %873 = vmatpush1.bf16.xpose.msra.mxu0 0
      %874 = vmatprep.subr.bf16.mxu0 0
      %875 = vmatpush1.bf16.xpose.msra.mxu0 0
      %876 = vmatprep.mubr.bf16.mxu0 0
      %877 = vmatmul.mubr.bf16.gmra.mrb[0].mxu0 %v839
      %v878 = vpop.f32.mrb[0].mxu0
      %v879 = vadd.f32 0.0, %v878
      %v880 = vpop.f32.mrb[0].mxu0
      %v881 = vpop.f32.mrb[0].mxu0
      %v882 = vpop.f32.mrb[0].mxu0
      %883 = vdwg.mxu0
      %v884 = vsel %vm360, %v879, -inf
      %885 = vmax.xlane.f32.xlu0 %v884
      %v886 = vpop.xlane.xlu0 %885
      %v887 = vsub.f32 %v879, %v886
      %v888 = vmul.f32 %v887, 1.442695
      %v889 = vpow.pop %v888
      %v890 = vsel %vm360, %v889, 0.0
      %891 = vadd.xlane.f32.xlu0 %v890
      %v892 = vpop.xlane.xlu0 %891
      %v893 = vpack.c.bf16 %v889, %v889
      %894 = vrot.lane.b32.xlu0 %v359, 104
      %v895 = vpop.permute.xlu0 %894
      %v897 = vsel %vm360, %v893, 0
      %v900 = vsel %vm420, %v895, 0
      %902 = vmatprep.subr.bf16.mxu0 0
      %903 = vmatpush1.bf16.msra.mxu0 %v900
      %904 = vmatprep.subr.bf16.mxu0 0
      %905 = vmatpush1.bf16.msra.mxu0 0
      %906 = vmatprep.subr.bf16.mxu0 0
      %907 = vmatpush1.bf16.msra.mxu0 0
      %908 = vmatprep.subr.bf16.mxu0 0
      %909 = vmatpush1.bf16.msra.mxu0 0
      %910 = vmatprep.subr.bf16.mxu0 0
      %911 = vmatpush1.bf16.msra.mxu0 0
      %912 = vmatprep.subr.bf16.mxu0 0
      %913 = vmatpush1.bf16.msra.mxu0 0
      %914 = vmatprep.subr.bf16.mxu0 0
      %915 = vmatpush1.bf16.msra.mxu0 0
      %916 = vmatprep.subr.bf16.mxu0 0
      %917 = vmatpush1.bf16.msra.mxu0 0
      %918 = vmatprep.subr.bf16.mxu0 0
      %919 = vmatpush1.bf16.msra.mxu0 0
      %920 = vmatprep.subr.bf16.mxu0 0
      %921 = vmatpush1.bf16.msra.mxu0 0
      %922 = vmatprep.subr.bf16.mxu0 0
      %923 = vmatpush1.bf16.msra.mxu0 0
      %924 = vmatprep.subr.bf16.mxu0 0
      %925 = vmatpush1.bf16.msra.mxu0 0
      %926 = vmatprep.subr.bf16.mxu0 0
      %927 = vmatpush1.bf16.msra.mxu0 0
      %928 = vmatprep.subr.bf16.mxu0 0
      %929 = vmatpush1.bf16.msra.mxu0 0
      %930 = vmatprep.subr.bf16.mxu0 0
      %931 = vmatpush1.bf16.msra.mxu0 0
      %932 = vmatprep.subr.bf16.mxu0 0
      %933 = vmatpush1.bf16.msra.mxu0 0
      %934 = vmatprep.mubr.bf16.mxu0 0
      %935 = vmatmul.mubr.bf16.gmra.mrb[0].mxu0 %v897
      %v936 = vpop.f32.mrb[0].mxu0
      %v937 = vadd.f32 0.0, %v936
      %v938 = vpop.f32.mrb[0].mxu0
      %v939 = vpop.f32.mrb[0].mxu0
      %v940 = vpop.f32.mrb[0].mxu0
      %941 = vdwg.mxu0
      %v942 = vrcp.pop %v892
      %v943 = vmul.f32 %v937, %v942
      %v944 = vpack.c.bf16 %v943, %v943
      %v945 = vld [vmem:[%s4 + $0xc] sm:$0xf]
      %v947 = vsel %vm360, %v944, 0
      %v950 = vsel %vm420, %v945, 0
      %952 = vmatprep.subr.bf16.mxu0 0
      %953 = vmatpush1.bf16.msra.mxu0 %v950
      %954 = vmatprep.subr.bf16.mxu0 0
      %955 = vmatpush1.bf16.msra.mxu0 0
      %956 = vmatprep.subr.bf16.mxu0 0
      %957 = vmatpush1.bf16.msra.mxu0 0
      %958 = vmatprep.subr.bf16.mxu0 0
      %959 = vmatpush1.bf16.msra.mxu0 0
      %960 = vmatprep.subr.bf16.mxu0 0
      %961 = vmatpush1.bf16.msra.mxu0 0
      %962 = vmatprep.subr.bf16.mxu0 0
      %963 = vmatpush1.bf16.msra.mxu0 0
      %964 = vmatprep.subr.bf16.mxu0 0
      %965 = vmatpush1.bf16.msra.mxu0 0
      %966 = vmatprep.subr.bf16.mxu0 0
      %967 = vmatpush1.bf16.msra.mxu0 0
      %968 = vmatprep.subr.bf16.mxu0 0
      %969 = vmatpush1.bf16.msra.mxu0 0
      %970 = vmatprep.subr.bf16.mxu0 0
      %971 = vmatpush1.bf16.msra.mxu0 0
      %972 = vmatprep.subr.bf16.mxu0 0
      %973 = vmatpush1.bf16.msra.mxu0 0
      %974 = vmatprep.subr.bf16.mxu0 0
      %975 = vmatpush1.bf16.msra.mxu0 0
      %976 = vmatprep.subr.bf16.mxu0 0
      %977 = vmatpush1.bf16.msra.mxu0 0
      %978 = vmatprep.subr.bf16.mxu0 0
      %979 = vmatpush1.bf16.msra.mxu0 0
      %980 = vmatprep.subr.bf16.mxu0 0
      %981 = vmatpush1.bf16.msra.mxu0 0
      %982 = vmatprep.subr.bf16.mxu0 0
      %983 = vmatpush1.bf16.msra.mxu0 0
      %984 = vmatprep.mubr.bf16.mxu0 0
      %985 = vmatmul.mubr.bf16.gmra.mrb[0].mxu0 %v947
      %v986 = vpop.f32.mrb[0].mxu0
      %v987 = vadd.f32 0.0, %v986
      %v988 = vpop.f32.mrb[0].mxu0
      %v989 = vpop.f32.mrb[0].mxu0
      %v990 = vpop.f32.mrb[0].mxu0
      %991 = vdwg.mxu0
      %v992 = vadd.f32 %v833, %v987
      %v993 = vld [vmem:[%s347] sm:$0xff]
      %v994 = vadd.f32 %v993, %v992
      %v995 = vld [vmem:[%s5] sm:$0x1]
      %v997 = vlaneseq
      %v998 = vshrl.u32 %v997, 7
      %v999 = vsub.s32 0, %v998
      %v1000 = vrot.slane %v995, %v999
      %v1002 = vadd.f32 %v994, %v1000
      %vm1003 = vcmask 261120
      %v1004 = vsel %vm1003, %v1002, 0.0
      %1005 = vadd.xlane.f32.xlu0 %v1004
      %v1006 = vpop.xlane.xlu0 %1005
      %v1007 = vrcp.pop 32.0
      %v1008 = vmul.f32 %v1006, %v1007
      %v1009 = vsub.f32 %v1002, %v1008
      %v1010 = vmul.f32 %v1009, %v1009
      %v1011 = vsel %vm1003, %v1010, 0.0
      %1012 = vadd.xlane.f32.xlu0 %v1011
      %v1013 = vpop.xlane.xlu0 %1012
      %v1014 = vmul.f32 %v1013, %v1007
      %v1015 = vadd.f32 %v1014, 1e-05
      %v1016 = vrsqrt.pop %v1015
      %v1017 = vmul.f32 %v1009, %v1016
      %v1018 = vld [vmem:[%s6] sm:$0x1]
      %v1020 = vlaneseq
      %v1021 = vshrl.u32 %v1020, 7
      %v1022 = vsub.s32 0, %v1021
      %v1023 = vrot.slane %v1018, %v1022
      %v1025 = vmul.f32 %v1017, %v1023
      %v1026 = vld [vmem:[%s7] sm:$0x1]
      %v1028 = vlaneseq
      %v1029 = vshrl.u32 %v1028, 7
      %v1030 = vsub.s32 0, %v1029
      %v1031 = vrot.slane %v1026, %v1030
      %v1033 = vadd.f32 %v1025, %v1031
      %1034 = vst.msk [vmem:[%s351] sm:$0xff] %vm1003, %v1033
      %p1035 = scmp.lt.s32.totalorder %s19, 1
      %s1036 = scalar_select %p1035, %s19, 1
      %s1037 = smul.addr %s1036, 8
      %s1038 = scalar_lea.vmem %s8, %s1037
      // Predicated region
      $region53: #{attention_layer_forward.4} parent=51 // pred_check
        %p1039 = pneg %p225
      $region54: #{attention_layer_forward.4} parent=51 // pred_check_branch
        %1041 = sbr.rel (%p1039) target = $region56
      $region55: #{attention_layer_forward.4} parent=51 // pred_region
        _
      $region56: #{attention_layer_forward.4} parent=51 // pred_fallthru
        _
    $region52: #{attention_layer_forward.4} parent=5 // pred_fallthru
      _
    %p1042 = scmp.le.s32.totalorder 2, %s14
    // Predicated region
    $region57: #{attention_layer_forward.4} parent=5 // pred_check
      %p1043 = pneg %p1042
    $region58: #{attention_layer_forward.4} parent=5 // pred_check_branch
      %1045 = sbr.rel (%p1043) target = $region60
    $region59: #{attention_layer_forward.4} parent=5 // pred_region
      %s1046 = ssub.s32 %s14, 2
      // Predicated region
      $region61: #{attention_layer_forward.4} parent=59 // pred_check
        %p1047 = pneg %p231
      $region62: #{attention_layer_forward.4} parent=59 // pred_check_branch
        %1049 = sbr.rel (%p1047) target = $region64
      $region63: #{attention_layer_forward.4} parent=59 // pred_region
        %p1050 = scmp.lt.s32.totalorder %s20, 1
        %s1051 = scalar_select %p1050, %s20, 1
        %s1052 = smul.addr %s1051, 8
        %s1053 = scalar_lea.vmem %s8, %s1052
      $region64: #{attention_layer_forward.4} parent=59 // pred_fallthru
        _
    $region60: #{attention_layer_forward.4} parent=5 // pred_fallthru
      _
  $region6: #{attention_layer_forward.4} parent=0 // loop_footer
    %s18 = sadd.s32 1, %s14
  $region7: #{attention_layer_forward.4} parent=0 // loop_footer_branch
    %13 = sbr.rel target = $region3
  $region8: #{attention_layer_forward.4} parent=0 // loop_exit
    _

// kernel: attention_layer_forward.5
$region0: #{attention_layer_forward.5}
  #allocation0 [shape = 'u32[]', space=smem, size = 0x4, offset = 0x4, fixed_abs, tag = 'smem constant byte address 0x4 - core index']
  #allocation1 [shape = 'u32[144,128]{1,0:T(1,128)}', space=vmem, size = 0x12000, scoped, tag = 'internal scratch']
  %s0 = inlined_call_operand.vmem [shape: f32[16,32], index: 0, kind: input, shape index: {}]
  %s1 = inlined_call_operand.vmem [shape: bf16[32,128], index: 1, kind: input, shape index: {}]
  %s2 = inlined_call_operand.vmem [shape: f32[1,128], index: 2, kind: input, shape index: {}]
  %s3 = inlined_call_operand.vmem [shape: bf16[128,32], index: 3, kind: input, shape index: {}]
  %s4 = inlined_call_operand.vmem [shape: f32[1,32], index: 4, kind: input, shape index: {}]
  %s5 = inlined_call_operand.vmem [shape: f32[1,32], index: 5, kind: input, shape index: {}]
  %s6 = inlined_call_operand.vmem [shape: f32[1,32], index: 6, kind: input, shape index: {}]
  %s7 = inlined_call_operand.vmem [shape: f32[16,32], index: 7, kind: output, shape index: {}]
  %s8 = sld [smem:[#allocation0]]
  $region38: #{attention_layer_forward.5} parent=0
    _
  %s10 = ssub.s32 1, %s8
  %s11 = scalar_select 0, %s10, %s8
  // Predicated region
  $region2: #{attention_layer_forward.5} parent=0 // pred_check
    _
  $region3: #{attention_layer_forward.5} parent=0 // pred_check_branch
    %13 = sbr.rel (0) target = $region5
  $region4: #{attention_layer_forward.5} parent=0 // pred_region
    _
  $region5: #{attention_layer_forward.5} parent=0 // pred_fallthru
    _
  // Predicated region
  $region6: #{attention_layer_forward.5} parent=0 // pred_check
    _
  $region7: #{attention_layer_forward.5} parent=0 // pred_check_branch
    %15 = sbr.rel (0) target = $region9
  $region8: #{attention_layer_forward.5} parent=0 // pred_region
    _
  $region9: #{attention_layer_forward.5} parent=0 // pred_fallthru
    _
  // Predicated region
  $region10: #{attention_layer_forward.5} parent=0 // pred_check
    _
  $region11: #{attention_layer_forward.5} parent=0 // pred_check_branch
    %17 = sbr.rel (0) target = $region13
  $region12: #{attention_layer_forward.5} parent=0 // pred_region
    _
  $region13: #{attention_layer_forward.5} parent=0 // pred_fallthru
    _
  // Predicated region
  $region14: #{attention_layer_forward.5} parent=0 // pred_check
    _
  $region15: #{attention_layer_forward.5} parent=0 // pred_check_branch
    %19 = sbr.rel (0) target = $region17
  $region16: #{attention_layer_forward.5} parent=0 // pred_region
    _
  $region17: #{attention_layer_forward.5} parent=0 // pred_fallthru
    _
  // Predicated region
  $region18: #{attention_layer_forward.5} parent=0 // pred_check
    _
  $region19: #{attention_layer_forward.5} parent=0 // pred_check_branch
    %21 = sbr.rel (0) target = $region21
  $region20: #{attention_layer_forward.5} parent=0 // pred_region
    _
  $region21: #{attention_layer_forward.5} parent=0 // pred_fallthru
    _
  // Predicated region
  $region22: #{attention_layer_forward.5} parent=0 // pred_check
    _
  $region23: #{attention_layer_forward.5} parent=0 // pred_check_branch
    %23 = sbr.rel (0) target = $region25
  $region24: #{attention_layer_forward.5} parent=0 // pred_region
    _
  $region25: #{attention_layer_forward.5} parent=0 // pred_fallthru
    _
  // Predicated region
  $region26: #{attention_layer_forward.5} parent=0 // pred_check
    _
  $region27: #{attention_layer_forward.5} parent=0 // pred_check_branch
    %25 = sbr.rel (0) target = $region29
  $region28: #{attention_layer_forward.5} parent=0 // pred_region
    _
  $region29: #{attention_layer_forward.5} parent=0 // pred_fallthru
    _
  %v27 = vld [vmem:[%s0] sm:$0xff]
  %v28 = vld [vmem:[%s0 + $0x8] sm:$0xff]
  %v29 = vpack.c.bf16 %v28, %v27
  %v30 = vld [vmem:[%s1] sm:$0xf]
  %v31 = vld [vmem:[%s1 + $0x4] sm:$0xf]
  %v32 = vld [vmem:[%s1 + $0x8] sm:$0xf]
  %v33 = vld [vmem:[%s1 + $0xc] sm:$0xf]
  %v34 = vld [vmem:[%s2] sm:$0x1]
  %v36 = vlaneseq
  %v37 = vshrl.u32 %v36, 7
  %v38 = vsub.s32 0, %v37
  %v39 = vrot.slane %v34, %v38
  %v45 = vunpack.c.l.b16 %v30
  %v46 = vunpack.c.l.b16 %v31
  %v47 = vunpack.c.l.b16 %v32
  %v48 = vunpack.c.l.b16 %v33
  %v49 = vpack.c.b16 %v46, %v45
  %v50 = vpack.c.b16 %v48, %v47
  %vm53 = vcmask 261120
  %v55 = vsel %vm53, %v29, 0
  %57 = vmatprep.subr.bf16.mxu0 0
  %58 = vmatpush1.bf16.msra.mxu0 %v49
  %59 = vmatprep.subr.bf16.mxu0 0
  %60 = vmatpush1.bf16.msra.mxu0 %v50
  %61 = vmatprep.subr.bf16.mxu0 0
  %62 = vmatpush1.bf16.msra.mxu0 0
  %63 = vmatprep.subr.bf16.mxu0 0
  %64 = vmatpush1.bf16.msra.mxu0 0
  %65 = vmatprep.subr.bf16.mxu0 0
  %66 = vmatpush1.bf16.msra.mxu0 0
  %67 = vmatprep.subr.bf16.mxu0 0
  %68 = vmatpush1.bf16.msra.mxu0 0
  %69 = vmatprep.subr.bf16.mxu0 0
  %70 = vmatpush1.bf16.msra.mxu0 0
  %71 = vmatprep.subr.bf16.mxu0 0
  %72 = vmatpush1.bf16.msra.mxu0 0
  %73 = vmatprep.subr.bf16.mxu0 0
  %74 = vmatpush1.bf16.msra.mxu0 0
  %75 = vmatprep.subr.bf16.mxu0 0
  %76 = vmatpush1.bf16.msra.mxu0 0
  %77 = vmatprep.subr.bf16.mxu0 0
  %78 = vmatpush1.bf16.msra.mxu0 0
  %79 = vmatprep.subr.bf16.mxu0 0
  %80 = vmatpush1.bf16.msra.mxu0 0
  %81 = vmatprep.subr.bf16.mxu0 0
  %82 = vmatpush1.bf16.msra.mxu0 0
  %83 = vmatprep.subr.bf16.mxu0 0
  %84 = vmatpush1.bf16.msra.mxu0 0
  %85 = vmatprep.subr.bf16.mxu0 0
  %86 = vmatpush1.bf16.msra.mxu0 0
  %87 = vmatprep.subr.bf16.mxu0 0
  %88 = vmatpush1.bf16.msra.mxu0 0
  %89 = vmatprep.mubr.bf16.mxu0 0
  %90 = vmatmul.mubr.bf16.gmra.mrb[0].mxu0 %v55
  %v91 = vpop.f32.mrb[0].mxu0
  %v92 = vadd.f32 %v39, %v91
  %v93 = vpop.f32.mrb[0].mxu0
  %v94 = vpop.f32.mrb[0].mxu0
  %v95 = vadd.f32 %v39, %v94
  %v96 = vpop.f32.mrb[0].mxu0
  %97 = vdwg.mxu0
  %v98 = vmax.f32 %v92, 0.0
  %v99 = vmax.f32 %v95, 0.0
  %v100 = vpack.c.bf16 %v99, %v98
  %v101 = vld [vmem:[%s3] sm:$0xf]
  %v102 = vld [vmem:[%s3 + $0x4] sm:$0xf]
  %v103 = vld [vmem:[%s3 + $0x8] sm:$0xf]
  %v104 = vld [vmem:[%s3 + $0xc] sm:$0xf]
  %v105 = vld [vmem:[%s3 + $0x10] sm:$0xf]
  %v106 = vld [vmem:[%s3 + $0x14] sm:$0xf]
  %v107 = vld [vmem:[%s3 + $0x18] sm:$0xf]
  %v108 = vld [vmem:[%s3 + $0x1c] sm:$0xf]
  %v109 = vld [vmem:[%s3 + $0x20] sm:$0xf]
  %v110 = vld [vmem:[%s3 + $0x24] sm:$0xf]
  %v111 = vld [vmem:[%s3 + $0x28] sm:$0xf]
  %v112 = vld [vmem:[%s3 + $0x2c] sm:$0xf]
  %v113 = vld [vmem:[%s3 + $0x30] sm:$0xf]
  %v114 = vld [vmem:[%s3 + $0x34] sm:$0xf]
  %v115 = vld [vmem:[%s3 + $0x38] sm:$0xf]
  %v116 = vld [vmem:[%s3 + $0x3c] sm:$0xf]
  %v117 = vld [vmem:[%s4] sm:$0x1]
  %v119 = vlaneseq
  %v120 = vshrl.u32 %v119, 7
  %v121 = vsub.s32 0, %v120
  %v122 = vrot.slane %v117, %v121
  %v140 = vunpack.c.l.b16 %v101
  %v141 = vunpack.c.l.b16 %v102
  %v142 = vunpack.c.l.b16 %v103
  %v143 = vunpack.c.l.b16 %v104
  %v144 = vunpack.c.l.b16 %v105
  %v145 = vunpack.c.l.b16 %v106
  %v146 = vunpack.c.l.b16 %v107
  %v147 = vunpack.c.l.b16 %v108
  %v148 = vunpack.c.l.b16 %v109
  %v149 = vunpack.c.l.b16 %v110
  %v150 = vunpack.c.l.b16 %v111
  %v151 = vunpack.c.l.b16 %v112
  %v152 = vunpack.c.l.b16 %v113
  %v153 = vunpack.c.l.b16 %v114
  %v154 = vunpack.c.l.b16 %v115
  %v155 = vunpack.c.l.b16 %v116
  %v156 = vpack.c.b16 %v141, %v140
  %v157 = vpack.c.b16 %v143, %v142
  %v158 = vpack.c.b16 %v145, %v144
  %v159 = vpack.c.b16 %v147, %v146
  %v160 = vpack.c.b16 %v149, %v148
  %v161 = vpack.c.b16 %v151, %v150
  %v162 = vpack.c.b16 %v153, %v152
  %v163 = vpack.c.b16 %v155, %v154
  %172 = vmatprep.subr.bf16.mxu0 0
  %173 = vmatpush1.bf16.msra.mxu0 %v156
  %174 = vmatprep.subr.bf16.mxu0 0
  %175 = vmatpush1.bf16.msra.mxu0 %v157
  %176 = vmatprep.subr.bf16.mxu0 0
  %177 = vmatpush1.bf16.msra.mxu0 %v158
  %178 = vmatprep.subr.bf16.mxu0 0
  %179 = vmatpush1.bf16.msra.mxu0 %v159
  %180 = vmatprep.subr.bf16.mxu0 0
  %181 = vmatpush1.bf16.msra.mxu0 %v160
  %182 = vmatprep.subr.bf16.mxu0 0
  %183 = vmatpush1.bf16.msra.mxu0 %v161
  %184 = vmatprep.subr.bf16.mxu0 0
  %185 = vmatpush1.bf16.msra.mxu0 %v162
  %186 = vmatprep.subr.bf16.mxu0 0
  %187 = vmatpush1.bf16.msra.mxu0 %v163
  %188 = vmatprep.subr.bf16.mxu0 0
  %189 = vmatpush1.bf16.msra.mxu0 0
  %190 = vmatprep.subr.bf16.mxu0 0
  %191 = vmatpush1.bf16.msra.mxu0 0
  %192 = vmatprep.subr.bf16.mxu0 0
  %193 = vmatpush1.bf16.msra.mxu0 0
  %194 = vmatprep.subr.bf16.mxu0 0
  %195 = vmatpush1.bf16.msra.mxu0 0
  %196 = vmatprep.subr.bf16.mxu0 0
  %197 = vmatpush1.bf16.msra.mxu0 0
  %198 = vmatprep.subr.bf16.mxu0 0
  %199 = vmatpush1.bf16.msra.mxu0 0
  %200 = vmatprep.subr.bf16.mxu0 0
  %201 = vmatpush1.bf16.msra.mxu0 0
  %202 = vmatprep.subr.bf16.mxu0 0
  %203 = vmatpush1.bf16.msra.mxu0 0
  %204 = vmatprep.mubr.bf16.mxu0 0
  %205 = vmatmul.mubr.bf16.gmra.mrb[0].mxu0 %v100
  %v206 = vpop.f32.mrb[0].mxu0
  %v207 = vadd.f32 %v122, %v206
  %v208 = vpop.f32.mrb[0].mxu0
  %v209 = vpop.f32.mrb[0].mxu0
  %v210 = vadd.f32 %v122, %v209
  %v211 = vpop.f32.mrb[0].mxu0
  %212 = vdwg.mxu0
  %v213 = vadd.f32 %v27, %v207
  %v214 = vadd.f32 %v28, %v210
  %v215 = vsel %vm53, %v213, 0.0
  %216 = vadd.xlane.f32.xlu0 %v215
  %v217 = vpop.xlane.xlu0 %216
  %v218 = vsel %vm53, %v214, 0.0
  %219 = vadd.xlane.f32.xlu0 %v218
  %v220 = vpop.xlane.xlu0 %219
  %v221 = vrcp.pop 32.0
  %v222 = vmul.f32 %v217, %v221
  %v223 = vmul.f32 %v220, %v221
  %v224 = vsub.f32 %v213, %v222
  %v225 = vsub.f32 %v214, %v223
  %v226 = vmul.f32 %v224, %v224
  %v227 = vmul.f32 %v225, %v225
  %v228 = vsel %vm53, %v226, 0.0
  %229 = vadd.xlane.f32.xlu0 %v228
  %v230 = vpop.xlane.xlu0 %229
  %v231 = vsel %vm53, %v227, 0.0
  %232 = vadd.xlane.f32.xlu0 %v231
  %v233 = vpop.xlane.xlu0 %232
  %v234 = vmul.f32 %v230, %v221
  %v235 = vmul.f32 %v233, %v221
  %v236 = vadd.f32 %v234, 1e-05
  %v237 = vadd.f32 %v235, 1e-05
  %v238 = vrsqrt.pop %v236
  %v239 = vrsqrt.pop %v237
  %v240 = vmul.f32 %v224, %v238
  %v241 = vmul.f32 %v225, %v239
  %v242 = vld [vmem:[%s5] sm:$0x1]
  %v244 = vlaneseq
  %v245 = vshrl.u32 %v244, 7
  %v246 = vsub.s32 0, %v245
  %v247 = vrot.slane %v242, %v246
  %v249 = vmul.f32 %v240, %v247
  %v250 = vmul.f32 %v241, %v247
  %v251 = vld [vmem:[%s6] sm:$0x1]
  %v253 = vlaneseq
  %v254 = vshrl.u32 %v253, 7
  %v255 = vsub.s32 0, %v254
  %v256 = vrot.slane %v251, %v255
  %v258 = vadd.f32 %v249, %v256
  %v259 = vadd.f32 %v250, %v256
  %260 = vst.msk [vmem:[%s7] sm:$0xff] %vm53, %v258
  %261 = vst.msk [vmem:[%s7 + $0x8] sm:$0xff] %vm53, %v259
  // Predicated region
  $region30: #{attention_layer_forward.5} parent=0 // pred_check
    _
  $region31: #{attention_layer_forward.5} parent=0 // pred_check_branch
    %263 = sbr.rel (0) target = $region33
  $region32: #{attention_layer_forward.5} parent=0 // pred_region
    _
  $region33: #{attention_layer_forward.5} parent=0 // pred_fallthru
    _
  // Predicated region
  $region34: #{attention_layer_forward.5} parent=0 // pred_check
    _
  $region35: #{attention_layer_forward.5} parent=0 // pred_check_branch
    %265 = sbr.rel (0) target = $region37
  $region36: #{attention_layer_forward.5} parent=0 // pred_region
    _
  $region37: #{attention_layer_forward.5} parent=0 // pred_fallthru
    _

</llo_original>
